<compile_context>
chip_gen: v7x
topology: tpu7x:2x2x1
jax: 0.10.0
libtpu: 0.0.40
codegen_flags: <defaults>
</compile_context>

<pallas_src>
import jax
import jax.numpy as jnp
from jax.experimental import pallas as pl
from jax.experimental.pallas import tpu as pltpu

BN_EPS = 1e-5
NORM_EPS = 1e-12


def _l2_normalize(x):
    # F.normalize(x, dim=-1, p=2): x / max(||x||, eps) == x * rsqrt(max(||x||^2, eps^2))
    ss = jnp.sum(x * x, axis=-1, keepdims=True)
    return x * jax.lax.rsqrt(jnp.maximum(ss, NORM_EPS * NORM_EPS))


def byol_loss_kernel(x_ref,                                   # (2B, D) f32, resident: [emb1; emb2]
                     w1_ref, b1_ref, g_ref, beta_ref,         # this layer's params
                     w2_ref, b2_ref, w3_ref, b3_ref,
                     out_ref,                                  # (1,) f32 in SMEM
                     act_ref):                                 # (2B, D) f32 VMEM carry
    i = pl.program_id(0)
    B2 = x_ref.shape[0]
    B = B2 // 2

    @pl.when(i == 0)
    def _():
        act_ref[...] = x_ref[...]

    p = act_ref[...]

    # Linear(D -> H): bf16 operands on the MXU, f32 accumulate.
    h = jnp.dot(p.astype(jnp.bfloat16), w1_ref[...],
                preferred_element_type=jnp.float32) + b1_ref[...]

    # BatchNorm1d (training mode), per-stream batch statistics, biased variance.
    # Halves h[:B] / h[B:] are exactly on f32 sublane-tile boundaries (B = 8).
    def bn_half(u):
        mu = jnp.mean(u, axis=0, keepdims=True)
        var = jnp.mean(u * u, axis=0, keepdims=True) - mu * mu
        var = jnp.maximum(var, 0.0)            # guard E[h^2]-mu^2 cancellation
        return (u - mu) * jax.lax.rsqrt(var + BN_EPS)

    h = jnp.concatenate([bn_half(h[:B]), bn_half(h[B:])], axis=0)
    h = h * g_ref[...] + beta_ref[...]
    h = jnp.maximum(h, 0.0)                    # ReLU

    # Linear(H -> H) + ReLU
    h = jnp.dot(h.astype(jnp.bfloat16), w2_ref[...],
                preferred_element_type=jnp.float32) + b2_ref[...]
    h = jnp.maximum(h, 0.0)

    # Linear(H -> D)
    h = jnp.dot(h.astype(jnp.bfloat16), w3_ref[...],
                preferred_element_type=jnp.float32) + b3_ref[...]
    act_ref[...] = h

    @pl.when(i == pl.num_programs(0) - 1)
    def _():
        x = x_ref[...]                          # targets (target encoder == online at init)
        n_p = _l2_normalize(act_ref[...])       # rows [0:B] = n(p1), rows [B:2B] = n(p2)
        n_t = _l2_normalize(x)
        s1 = jnp.sum(n_p[:B] * n_t[B:], axis=-1, keepdims=True)   # <n(p1), n(t2)>
        s2 = jnp.sum(n_p[B:] * n_t[:B], axis=-1, keepdims=True)   # <n(p2), n(t1)>
        # mean(2 - 2*s1) + mean(2 - 2*s2) = 4 - 2*(mean(s1) + mean(s2))
        out_ref[0] = 4.0 - 2.0 * (jnp.mean(s1) + jnp.mean(s2))


def prepare_params(params):
    """One-time weight prep. Call OUTSIDE the per-step path (cache the result).

    Casts the three matmul weight stacks to bfloat16 (halves weight HBM->VMEM
    traffic; MXU is bf16-native).  Biases / BN affine stay f32 so all
    elementwise math stays f32.  No hidden-width padding: H=320 is handled by
    Mosaic/MXU with a masked partial lane group.
    """
    prepped = dict(params)
    for k in ("w1", "w2", "w3"):
        prepped[k] = params[k].astype(jnp.bfloat16)
    return prepped


@jax.jit
def byol_loss(emb1, emb2, prepped):
    """emb1, emb2: (B, D) embeddings.  prepped: output of prepare_params()."""
    B, D = emb1.shape
    H = prepped["w1"].shape[-1]
    B2 = 2 * B
    x = jnp.concatenate([emb1, emb2], axis=0).astype(jnp.float32)   # (2B, D)

    inputs = (x, prepped["w1"], prepped["b1"], prepped["gamma"], prepped["beta"],
              prepped["w2"], prepped["b2"], prepped["w3"], prepped["b3"])

    flops = 2 * B2 * 3 * (D * H + H * H + H * D)
    transcendentals = 3 * 2 * H + 2 * B2
    bytes_accessed = sum(int(a.size) * a.dtype.itemsize for a in inputs) + 4

    grid_spec = pltpu.PrefetchScalarGridSpec(
        num_scalar_prefetch=0,
        grid=(3,),                                   # one grid step per predictor MLP layer
        in_specs=[
            pl.BlockSpec((B2, D), lambda i: (0, 0)),            # x: resident across layers
            pl.BlockSpec((None, D, H), lambda i: (i, 0, 0)),    # w1[i] (bf16)
            pl.BlockSpec((None, 1, H), lambda i: (i, 0, 0)),    # b1[i]
            pl.BlockSpec((None, 1, H), lambda i: (i, 0, 0)),    # gamma[i]
            pl.BlockSpec((None, 1, H), lambda i: (i, 0, 0)),    # beta[i]
            pl.BlockSpec((None, H, H), lambda i: (i, 0, 0)),    # w2[i] (bf16)
            pl.BlockSpec((None, 1, H), lambda i: (i, 0, 0)),    # b2[i]
            pl.BlockSpec((None, H, D), lambda i: (i, 0, 0)),    # w3[i] (bf16)
            pl.BlockSpec((None, 1, D), lambda i: (i, 0, 0)),    # b3[i]
        ],
        out_specs=pl.BlockSpec(memory_space=pltpu.MemorySpace.SMEM),
        scratch_shapes=[pltpu.VMEM((B2, D), jnp.float32)],      # activation carry
    )

    out = pl.pallas_call(
        byol_loss_kernel,
        out_shape=jax.ShapeDtypeStruct((1,), jnp.float32),
        grid_spec=grid_spec,
        compiler_params=pltpu.CompilerParams(
            dimension_semantics=("arbitrary",)),    # layer i+1 depends on layer i
        cost_estimate=pl.CostEstimate(
            flops=flops,
            transcendentals=transcendentals,
            bytes_accessed=bytes_accessed,
        ),
    )(*inputs)
    return out[0]


def init_params(key, dim, hidden):
    """Three stacked MLPs: Linear(D,H) -> BN(H) -> ReLU -> Linear(H,H) -> ReLU -> Linear(H,D)."""
    ks = jax.random.split(key, 6)
    scale = 0.05
    return {
        "w1": scale * jax.random.normal(ks[0], (3, dim, hidden), jnp.float32),
        "b1": scale * jax.random.normal(ks[1], (3, 1, hidden), jnp.float32),
        "gamma": jnp.ones((3, 1, hidden), jnp.float32),   # BatchNorm1d weight default
        "beta": jnp.zeros((3, 1, hidden), jnp.float32),   # BatchNorm1d bias default
        "w2": scale * jax.random.normal(ks[2], (3, hidden, hidden), jnp.float32),
        "b2": scale * jax.random.normal(ks[3], (3, 1, hidden), jnp.float32),
        "w3": scale * jax.random.normal(ks[4], (3, hidden, dim), jnp.float32),
        "b3": scale * jax.random.normal(ks[5], (3, 1, dim), jnp.float32),
    }


def byol_loss_ref(emb1, emb2, params):
    """Pure-JAX f32 reference matching the PyTorch module semantics."""
    def mlp(x, i):
        h = x @ params["w1"][i] + params["b1"][i]
        mu = jnp.mean(h, axis=0, keepdims=True)
        var = jnp.mean((h - mu) ** 2, axis=0, keepdims=True)
        h = (h - mu) / jnp.sqrt(var + BN_EPS) * params["gamma"][i] + params["beta"][i]
        h = jax.nn.relu(h)
        h = jax.nn.relu(h @ params["w2"][i] + params["b2"][i])
        return h @ params["w3"][i] + params["b3"][i]

    p1, p2 = emb1, emb2
    for i in range(3):
        p1, p2 = mlp(p1, i), mlp(p2, i)

    def lf(x, y):
        x = x / jnp.maximum(jnp.linalg.norm(x, axis=-1, keepdims=True), NORM_EPS)
        y = y / jnp.maximum(jnp.linalg.norm(y, axis=-1, keepdims=True), NORM_EPS)
        return 2 - 2 * jnp.sum(x * y, axis=-1)

    return jnp.mean(lf(p1, emb2) + lf(p2, emb1))


if __name__ == "__main__":
    B = 8          # batch
    D = 32         # sentence_embedding_dimension
    H = 10 * D     # MLP hidden size (10 * dim, per the module)

    key = jax.random.PRNGKey(0)
    k_e1, k_e2, k_p = jax.random.split(key, 3)
    emb1 = jax.random.normal(k_e1, (B, D), jnp.float32)   # rep_one['sentence_embedding']
    emb2 = jax.random.normal(k_e2, (B, D), jnp.float32)   # rep_two['sentence_embedding']
    params = init_params(k_p, D, H)

    # One-time weight prep (bf16 cast) -- intentionally off the per-step path.
    prepped = jax.tree_util.tree_map(jax.block_until_ready, prepare_params(params))

    loss = jax.block_until_ready(byol_loss(emb1, emb2, prepped))
    ref = jax.block_until_ready(byol_loss_ref(emb1, emb2, params))

    assert jnp.isfinite(loss), "non-finite loss"
    # bf16 weights -> loosened tolerance vs the f32 reference (scalar loss).
    assert jnp.allclose(loss, ref, rtol=3e-2, atol=1e-2), (loss, ref)
    print("KERNEL_OK")
</pallas_src>

<mosaic_0001>
module attributes {stable_mosaic.version = 11 : i64} {
  func.func @byol_loss_kernel(%arg0: i32, %arg1: memref<16x32xf32, #tpu.memory_space<vmem>>, %arg2: memref<1x32x320xbf16, #tpu.memory_space<vmem>>, %arg3: memref<1x1x320xf32, #tpu.memory_space<vmem>>, %arg4: memref<1x1x320xf32, #tpu.memory_space<vmem>>, %arg5: memref<1x1x320xf32, #tpu.memory_space<vmem>>, %arg6: memref<1x320x320xbf16, #tpu.memory_space<vmem>>, %arg7: memref<1x1x320xf32, #tpu.memory_space<vmem>>, %arg8: memref<1x320x32xbf16, #tpu.memory_space<vmem>>, %arg9: memref<1x1x32xf32, #tpu.memory_space<vmem>>, %arg10: memref<1xf32, #tpu.memory_space<smem>>, %arg11: memref<16x32xf32, #tpu.memory_space<vmem>>) attributes {dimension_semantics = [#tpu.dimension_semantics<arbitrary>], iteration_bounds = array<i64: 3>, scalar_prefetch = 0 : i64, scratch_operands = 1 : i64, tpu.core_type = #tpu.core_type<tc>, window_params = [{pipeline_mode = #tpu.pipeline_mode<synchronous>, transform_indices = @transform_0, window_bounds = array<i64: 16, 32>}, {transform_indices = @transform_1, window_bounds = array<i64: 1, 32, 320>}, {transform_indices = @transform_2, window_bounds = array<i64: 1, 1, 320>}, {transform_indices = @transform_3, window_bounds = array<i64: 1, 1, 320>}, {transform_indices = @transform_4, window_bounds = array<i64: 1, 1, 320>}, {transform_indices = @transform_5, window_bounds = array<i64: 1, 320, 320>}, {transform_indices = @transform_6, window_bounds = array<i64: 1, 1, 320>}, {transform_indices = @transform_7, window_bounds = array<i64: 1, 320, 32>}, {transform_indices = @transform_8, window_bounds = array<i64: 1, 1, 32>}, {transform_indices = @transform_9, window_bounds = array<i64: 1>}]} {
    %c0_i32 = arith.constant 0 : i32
    %0 = arith.cmpi eq, %arg0, %c0_i32 : i32
    %1 = arith.extui %0 : i1 to i32
    %c0_i32_0 = arith.constant 0 : i32
    %2 = arith.cmpi ne, %1, %c0_i32_0 : i32
    scf.if %2 {
      %c0_45 = arith.constant 0 : index
      %c0_46 = arith.constant 0 : index
      %87 = vector.load %arg1[%c0_45, %c0_46] : memref<16x32xf32, #tpu.memory_space<vmem>>, vector<16x32xf32>
      %c0_47 = arith.constant 0 : index
      %c0_48 = arith.constant 0 : index
      %88 = vector.load %arg11[%c0_47, %c0_48] : memref<16x32xf32, #tpu.memory_space<vmem>>, vector<16x32xf32>
      tpu.vector_store %arg11[%c0_47, %c0_48], %87 {strides = array<i32>} : memref<16x32xf32, #tpu.memory_space<vmem>>, vector<16x32xf32>,
    } else {
    }
    %c0 = arith.constant 0 : index
    %c0_1 = arith.constant 0 : index
    %3 = vector.load %arg11[%c0, %c0_1] : memref<16x32xf32, #tpu.memory_space<vmem>>, vector<16x32xf32>
    %4 = arith.truncf %3 : vector<16x32xf32> to vector<16x32xbf16>
    %c0_2 = arith.constant 0 : index
    %c0_3 = arith.constant 0 : index
    %c0_4 = arith.constant 0 : index
    %5 = vector.load %arg2[%c0_2, %c0_3, %c0_4] : memref<1x32x320xbf16, #tpu.memory_space<vmem>>, vector<1x32x320xbf16>
    %6 = vector.shape_cast %5 : vector<1x32x320xbf16> to vector<32x320xbf16>
    %cst = arith.constant dense<0.000000e+00> : vector<16x320xf32>
    %7 = tpu.matmul %4, %6, %cst {dimension_numbers = #tpu.dot_dimension_numbers<[1], [0], [0], [1], [0, 0, 1, 1], [], []>} : vector<16x32xbf16>, vector<32x320xbf16>, vector<16x320xf32> -> vector<16x320xf32>
    %c0_5 = arith.constant 0 : index
    %c0_6 = arith.constant 0 : index
    %c0_7 = arith.constant 0 : index
    %8 = vector.load %arg3[%c0_5, %c0_6, %c0_7] : memref<1x1x320xf32, #tpu.memory_space<vmem>>, vector<1x1x320xf32>
    %9 = vector.shape_cast %8 : vector<1x1x320xf32> to vector<1x320xf32>
    %10 = vector.broadcast %9 : vector<1x320xf32> to vector<16x320xf32>
    %11 = arith.addf %7, %10 : vector<16x320xf32>
    %12 = vector.extract_strided_slice %11 {offsets = [0, 0], sizes = [8, 320], strides = [1, 1]} : vector<16x320xf32> to vector<8x320xf32>
    %cst_8 = arith.constant dense<0.000000e+00> : vector<320xf32>
    %13 = vector.multi_reduction <add>, %12, %cst_8 [0] : vector<8x320xf32> to vector<320xf32>
    %14 = vector.shape_cast %13 : vector<320xf32> to vector<1x320xf32>
    %cst_9 = arith.constant 8.000000e+00 : f32
    %15 = vector.broadcast %cst_9 : f32 to vector<1x320xf32>
    %16 = arith.divf %14, %15 : vector<1x320xf32>
    %17 = arith.mulf %12, %12 : vector<8x320xf32>
    %cst_10 = arith.constant dense<0.000000e+00> : vector<320xf32>
    %18 = vector.multi_reduction <add>, %17, %cst_10 [0] : vector<8x320xf32> to vector<320xf32>
    %19 = vector.shape_cast %18 : vector<320xf32> to vector<1x320xf32>
    %cst_11 = arith.constant 8.000000e+00 : f32
    %20 = vector.broadcast %cst_11 : f32 to vector<1x320xf32>
    %21 = arith.divf %19, %20 : vector<1x320xf32>
    %22 = arith.mulf %16, %16 : vector<1x320xf32>
    %23 = arith.subf %21, %22 : vector<1x320xf32>
    %cst_12 = arith.constant 0.000000e+00 : f32
    %24 = vector.broadcast %cst_12 : f32 to vector<1x320xf32>
    %25 = arith.maximumf %23, %24 : vector<1x320xf32>
    %26 = vector.broadcast %16 : vector<1x320xf32> to vector<8x320xf32>
    %27 = arith.subf %12, %26 : vector<8x320xf32>
    %cst_13 = arith.constant 9.99999974E-6 : f32
    %28 = vector.broadcast %cst_13 : f32 to vector<1x320xf32>
    %29 = arith.addf %25, %28 : vector<1x320xf32>
    %30 = math.rsqrt %29 : vector<1x320xf32>
    %31 = vector.broadcast %30 : vector<1x320xf32> to vector<8x320xf32>
    %32 = arith.mulf %27, %31 : vector<8x320xf32>
    %33 = vector.extract_strided_slice %11 {offsets = [8, 0], sizes = [8, 320], strides = [1, 1]} : vector<16x320xf32> to vector<8x320xf32>
    %cst_14 = arith.constant dense<0.000000e+00> : vector<320xf32>
    %34 = vector.multi_reduction <add>, %33, %cst_14 [0] : vector<8x320xf32> to vector<320xf32>
    %35 = vector.shape_cast %34 : vector<320xf32> to vector<1x320xf32>
    %cst_15 = arith.constant 8.000000e+00 : f32
    %36 = vector.broadcast %cst_15 : f32 to vector<1x320xf32>
    %37 = arith.divf %35, %36 : vector<1x320xf32>
    %38 = arith.mulf %33, %33 : vector<8x320xf32>
    %cst_16 = arith.constant dense<0.000000e+00> : vector<320xf32>
    %39 = vector.multi_reduction <add>, %38, %cst_16 [0] : vector<8x320xf32> to vector<320xf32>
    %40 = vector.shape_cast %39 : vector<320xf32> to vector<1x320xf32>
    %cst_17 = arith.constant 8.000000e+00 : f32
    %41 = vector.broadcast %cst_17 : f32 to vector<1x320xf32>
    %42 = arith.divf %40, %41 : vector<1x320xf32>
    %43 = arith.mulf %37, %37 : vector<1x320xf32>
    %44 = arith.subf %42, %43 : vector<1x320xf32>
    %cst_18 = arith.constant 0.000000e+00 : f32
    %45 = vector.broadcast %cst_18 : f32 to vector<1x320xf32>
    %46 = arith.maximumf %44, %45 : vector<1x320xf32>
    %47 = vector.broadcast %37 : vector<1x320xf32> to vector<8x320xf32>
    %48 = arith.subf %33, %47 : vector<8x320xf32>
    %cst_19 = arith.constant 9.99999974E-6 : f32
    %49 = vector.broadcast %cst_19 : f32 to vector<1x320xf32>
    %50 = arith.addf %46, %49 : vector<1x320xf32>
    %51 = math.rsqrt %50 : vector<1x320xf32>
    %52 = vector.broadcast %51 : vector<1x320xf32> to vector<8x320xf32>
    %53 = arith.mulf %48, %52 : vector<8x320xf32>
    %54 = tpu.concatenate %32, %53 in 0 : vector<8x320xf32>, vector<8x320xf32> -> vector<16x320xf32>
    %c0_20 = arith.constant 0 : index
    %c0_21 = arith.constant 0 : index
    %c0_22 = arith.constant 0 : index
    %55 = vector.load %arg4[%c0_20, %c0_21, %c0_22] : memref<1x1x320xf32, #tpu.memory_space<vmem>>, vector<1x1x320xf32>
    %56 = vector.shape_cast %55 : vector<1x1x320xf32> to vector<1x320xf32>
    %57 = vector.broadcast %56 : vector<1x320xf32> to vector<16x320xf32>
    %58 = arith.mulf %54, %57 : vector<16x320xf32>
    %c0_23 = arith.constant 0 : index
    %c0_24 = arith.constant 0 : index
    %c0_25 = arith.constant 0 : index
    %59 = vector.load %arg5[%c0_23, %c0_24, %c0_25] : memref<1x1x320xf32, #tpu.memory_space<vmem>>, vector<1x1x320xf32>
    %60 = vector.shape_cast %59 : vector<1x1x320xf32> to vector<1x320xf32>
    %61 = vector.broadcast %60 : vector<1x320xf32> to vector<16x320xf32>
    %62 = arith.addf %58, %61 : vector<16x320xf32>
    %cst_26 = arith.constant 0.000000e+00 : f32
    %63 = vector.broadcast %cst_26 : f32 to vector<16x320xf32>
    %64 = arith.maximumf %62, %63 : vector<16x320xf32>
    %65 = arith.truncf %64 : vector<16x320xf32> to vector<16x320xbf16>
    %c0_27 = arith.constant 0 : index
    %c0_28 = arith.constant 0 : index
    %c0_29 = arith.constant 0 : index
    %66 = vector.load %arg6[%c0_27, %c0_28, %c0_29] : memref<1x320x320xbf16, #tpu.memory_space<vmem>>, vector<1x320x320xbf16>
    %67 = vector.shape_cast %66 : vector<1x320x320xbf16> to vector<320x320xbf16>
    %cst_30 = arith.constant dense<0.000000e+00> : vector<16x320xf32>
    %68 = tpu.matmul %65, %67, %cst_30 {dimension_numbers = #tpu.dot_dimension_numbers<[1], [0], [0], [1], [0, 0, 1, 1], [], []>} : vector<16x320xbf16>, vector<320x320xbf16>, vector<16x320xf32> -> vector<16x320xf32>
    %c0_31 = arith.constant 0 : index
    %c0_32 = arith.constant 0 : index
    %c0_33 = arith.constant 0 : index
    %69 = vector.load %arg7[%c0_31, %c0_32, %c0_33] : memref<1x1x320xf32, #tpu.memory_space<vmem>>, vector<1x1x320xf32>
    %70 = vector.shape_cast %69 : vector<1x1x320xf32> to vector<1x320xf32>
    %71 = vector.broadcast %70 : vector<1x320xf32> to vector<16x320xf32>
    %72 = arith.addf %68, %71 : vector<16x320xf32>
    %cst_34 = arith.constant 0.000000e+00 : f32
    %73 = vector.broadcast %cst_34 : f32 to vector<16x320xf32>
    %74 = arith.maximumf %72, %73 : vector<16x320xf32>
    %75 = arith.truncf %74 : vector<16x320xf32> to vector<16x320xbf16>
    %c0_35 = arith.constant 0 : index
    %c0_36 = arith.constant 0 : index
    %c0_37 = arith.constant 0 : index
    %76 = vector.load %arg8[%c0_35, %c0_36, %c0_37] : memref<1x320x32xbf16, #tpu.memory_space<vmem>>, vector<1x320x32xbf16>
    %77 = vector.shape_cast %76 : vector<1x320x32xbf16> to vector<320x32xbf16>
    %cst_38 = arith.constant dense<0.000000e+00> : vector<16x32xf32>
    %78 = tpu.matmul %75, %77, %cst_38 {dimension_numbers = #tpu.dot_dimension_numbers<[1], [0], [0], [1], [0, 0, 1, 1], [], []>} : vector<16x320xbf16>, vector<320x32xbf16>, vector<16x32xf32> -> vector<16x32xf32>
    %c0_39 = arith.constant 0 : index
    %c0_40 = arith.constant 0 : index
    %c0_41 = arith.constant 0 : index
    %79 = vector.load %arg9[%c0_39, %c0_40, %c0_41] : memref<1x1x32xf32, #tpu.memory_space<vmem>>, vector<1x1x32xf32>
    %80 = vector.shape_cast %79 : vector<1x1x32xf32> to vector<1x32xf32>
    %81 = vector.broadcast %80 : vector<1x32xf32> to vector<16x32xf32>
    %82 = arith.addf %78, %81 : vector<16x32xf32>
    %c0_42 = arith.constant 0 : index
    %c0_43 = arith.constant 0 : index
    %83 = vector.load %arg11[%c0_42, %c0_43] : memref<16x32xf32, #tpu.memory_space<vmem>>, vector<16x32xf32>
    tpu.vector_store %arg11[%c0_42, %c0_43], %82 {strides = array<i32>} : memref<16x32xf32, #tpu.memory_space<vmem>>, vector<16x32xf32>,
    %c2_i32 = arith.constant 2 : i32
    %84 = arith.cmpi eq, %arg0, %c2_i32 : i32
    %85 = arith.extui %84 : i1 to i32
    %c0_i32_44 = arith.constant 0 : i32
    %86 = arith.cmpi ne, %85, %c0_i32_44 : i32
    scf.if %86 {
      %c0_45 = arith.constant 0 : index
      %c0_46 = arith.constant 0 : index
      %87 = vector.load %arg1[%c0_45, %c0_46] : memref<16x32xf32, #tpu.memory_space<vmem>>, vector<16x32xf32>
      %c0_47 = arith.constant 0 : index
      %c0_48 = arith.constant 0 : index
      %88 = vector.load %arg11[%c0_47, %c0_48] : memref<16x32xf32, #tpu.memory_space<vmem>>, vector<16x32xf32>
      %89 = arith.mulf %88, %88 : vector<16x32xf32>
      %cst_49 = arith.constant dense<0.000000e+00> : vector<16xf32>
      %90 = vector.multi_reduction <add>, %89, %cst_49 [1] : vector<16x32xf32> to vector<16xf32>
      %91 = vector.shape_cast %90 : vector<16xf32> to vector<16x1xf32>
      %cst_50 = arith.constant 1.000000e-24 : f32
      %92 = vector.broadcast %cst_50 : f32 to vector<16x1xf32>
      %93 = arith.maximumf %91, %92 : vector<16x1xf32>
      %94 = math.rsqrt %93 : vector<16x1xf32>
      %95 = vector.broadcast %94 : vector<16x1xf32> to vector<16x32xf32>
      %96 = arith.mulf %88, %95 : vector<16x32xf32>
      %97 = arith.mulf %87, %87 : vector<16x32xf32>
      %cst_51 = arith.constant dense<0.000000e+00> : vector<16xf32>
      %98 = vector.multi_reduction <add>, %97, %cst_51 [1] : vector<16x32xf32> to vector<16xf32>
      %99 = vector.shape_cast %98 : vector<16xf32> to vector<16x1xf32>
      %cst_52 = arith.constant 1.000000e-24 : f32
      %100 = vector.broadcast %cst_52 : f32 to vector<16x1xf32>
      %101 = arith.maximumf %99, %100 : vector<16x1xf32>
      %102 = math.rsqrt %101 : vector<16x1xf32>
      %103 = vector.broadcast %102 : vector<16x1xf32> to vector<16x32xf32>
      %104 = arith.mulf %87, %103 : vector<16x32xf32>
      %105 = vector.extract_strided_slice %96 {offsets = [0, 0], sizes = [8, 32], strides = [1, 1]} : vector<16x32xf32> to vector<8x32xf32>
      %106 = vector.extract_strided_slice %104 {offsets = [8, 0], sizes = [8, 32], strides = [1, 1]} : vector<16x32xf32> to vector<8x32xf32>
      %107 = arith.mulf %105, %106 : vector<8x32xf32>
      %cst_53 = arith.constant dense<0.000000e+00> : vector<8xf32>
      %108 = vector.multi_reduction <add>, %107, %cst_53 [1] : vector<8x32xf32> to vector<8xf32>
      %109 = vector.shape_cast %108 : vector<8xf32> to vector<8x1xf32>
      %110 = vector.extract_strided_slice %96 {offsets = [8, 0], sizes = [8, 32], strides = [1, 1]} : vector<16x32xf32> to vector<8x32xf32>
      %111 = vector.extract_strided_slice %104 {offsets = [0, 0], sizes = [8, 32], strides = [1, 1]} : vector<16x32xf32> to vector<8x32xf32>
      %112 = arith.mulf %110, %111 : vector<8x32xf32>
      %cst_54 = arith.constant dense<0.000000e+00> : vector<8xf32>
      %113 = vector.multi_reduction <add>, %112, %cst_54 [1] : vector<8x32xf32> to vector<8xf32>
      %114 = vector.shape_cast %113 : vector<8xf32> to vector<8x1xf32>
      %115 = vector.shape_cast %109 : vector<8x1xf32> to vector<1x8x1xf32>
      %cst_55 = arith.constant dense<0.000000e+00> : vector<1xf32>
      %116 = vector.multi_reduction <add>, %115, %cst_55 [1, 2] : vector<1x8x1xf32> to vector<1xf32>
      %117 = vector.shape_cast %116 : vector<1xf32> to vector<1x1x1xf32>
      %118 = vector.extract %117[0, 0, 0] : f32 from vector<1x1x1xf32>
      %cst_56 = arith.constant 8.000000e+00 : f32
      %119 = arith.divf %118, %cst_56 : f32
      %120 = vector.shape_cast %114 : vector<8x1xf32> to vector<1x8x1xf32>
      %cst_57 = arith.constant dense<0.000000e+00> : vector<1xf32>
      %121 = vector.multi_reduction <add>, %120, %cst_57 [1, 2] : vector<1x8x1xf32> to vector<1xf32>
      %122 = vector.shape_cast %121 : vector<1xf32> to vector<1x1x1xf32>
      %123 = vector.extract %122[0, 0, 0] : f32 from vector<1x1x1xf32>
      %cst_58 = arith.constant 8.000000e+00 : f32
      %124 = arith.divf %123, %cst_58 : f32
      %125 = arith.addf %119, %124 : f32
      %cst_59 = arith.constant 2.000000e+00 : f32
      %126 = arith.mulf %cst_59, %125 : f32
      %cst_60 = arith.constant 4.000000e+00 : f32
      %127 = arith.subf %cst_60, %126 : f32
      %c0_61 = arith.constant 0 : index
      %128 = memref.load %arg10[%c0_61] : memref<1xf32, #tpu.memory_space<smem>>
      memref.store %127, %arg10[%c0_61] : memref<1xf32, #tpu.memory_space<smem>>
    } else {
    }
    return
  }
  func.func @transform_0(%arg0: i32) -> (i32, i32) {
    %c0_i32 = arith.constant 0 : i32
    %c0_i32_0 = arith.constant 0 : i32
    %c0_i32_1 = arith.constant 0 : i32
    return %c0_i32, %c0_i32_0 : i32, i32
  }
  func.func @transform_1(%arg0: i32) -> (i32, i32, i32) {
    %c0_i32 = arith.constant 0 : i32
    %c0_i32_0 = arith.constant 0 : i32
    %c0_i32_1 = arith.constant 0 : i32
    return %arg0, %c0_i32, %c0_i32_0 : i32, i32, i32
  }
  func.func @transform_2(%arg0: i32) -> (i32, i32, i32) {
    %c0_i32 = arith.constant 0 : i32
    %c0_i32_0 = arith.constant 0 : i32
    %c0_i32_1 = arith.constant 0 : i32
    return %arg0, %c0_i32, %c0_i32_0 : i32, i32, i32
  }
  func.func @transform_3(%arg0: i32) -> (i32, i32, i32) {
    %c0_i32 = arith.constant 0 : i32
    %c0_i32_0 = arith.constant 0 : i32
    %c0_i32_1 = arith.constant 0 : i32
    return %arg0, %c0_i32, %c0_i32_0 : i32, i32, i32
  }
  func.func @transform_4(%arg0: i32) -> (i32, i32, i32) {
    %c0_i32 = arith.constant 0 : i32
    %c0_i32_0 = arith.constant 0 : i32
    %c0_i32_1 = arith.constant 0 : i32
    return %arg0, %c0_i32, %c0_i32_0 : i32, i32, i32
  }
  func.func @transform_5(%arg0: i32) -> (i32, i32, i32) {
    %c0_i32 = arith.constant 0 : i32
    %c0_i32_0 = arith.constant 0 : i32
    %c0_i32_1 = arith.constant 0 : i32
    return %arg0, %c0_i32, %c0_i32_0 : i32, i32, i32
  }
  func.func @transform_6(%arg0: i32) -> (i32, i32, i32) {
    %c0_i32 = arith.constant 0 : i32
    %c0_i32_0 = arith.constant 0 : i32
    %c0_i32_1 = arith.constant 0 : i32
    return %arg0, %c0_i32, %c0_i32_0 : i32, i32, i32
  }
  func.func @transform_7(%arg0: i32) -> (i32, i32, i32) {
    %c0_i32 = arith.constant 0 : i32
    %c0_i32_0 = arith.constant 0 : i32
    %c0_i32_1 = arith.constant 0 : i32
    return %arg0, %c0_i32, %c0_i32_0 : i32, i32, i32
  }
  func.func @transform_8(%arg0: i32) -> (i32, i32, i32) {
    %c0_i32 = arith.constant 0 : i32
    %c0_i32_0 = arith.constant 0 : i32
    %c0_i32_1 = arith.constant 0 : i32
    return %arg0, %c0_i32, %c0_i32_0 : i32, i32, i32
  }
  func.func @transform_9(%arg0: i32) -> i32 {
    %c0_i32 = arith.constant 0 : i32
    %c0_i32_0 = arith.constant 0 : i32
    return %c0_i32 : i32
  }
}

</mosaic_0001>

<llo_original>
// kernel: byol_loss.1
$region0: #{byol_loss.1}
  #allocation0 [shape = 'u32[]', space=smem, size = 0x4, offset = 0x4, fixed_abs, tag = 'smem constant byte address 0x4 - core index']
  #allocation1 [shape = 'u32[144,128]{1,0:T(1,128)}', space=vmem, size = 0x12000, scoped, tag = 'internal scratch']
  #allocation2 [shape = 'f32[16,32]{1,0:T(8,128)}', space=vmem, size = 0x2000, scoped, tag = 'scratch operand']
  %s0 = inlined_call_operand.vmem [shape: f32[16,32], index: 0, kind: input, shape index: {}]
  %s1 = inlined_call_operand.vmem [shape: bf16[3,32,320], index: 1, kind: input, shape index: {}]
  %s2 = inlined_call_operand.vmem [shape: f32[3,1,320], index: 2, kind: input, shape index: {}]
  %s3 = inlined_call_operand.vmem [shape: f32[3,1,320], index: 3, kind: input, shape index: {}]
  %s4 = inlined_call_operand.vmem [shape: f32[3,1,320], index: 4, kind: input, shape index: {}]
  %s5 = inlined_call_operand.hbm [shape: bf16[3,320,320], index: 5, kind: input, shape index: {}]
  %s6 = inlined_call_operand.vmem [shape: f32[3,1,320], index: 6, kind: input, shape index: {}]
  %s7 = inlined_call_operand.vmem [shape: bf16[3,320,32], index: 7, kind: input, shape index: {}]
  %s8 = inlined_call_operand.vmem [shape: f32[3,1,32], index: 8, kind: input, shape index: {}]
  %s9 = inlined_call_operand.hbm [shape: f32[1], index: 9, kind: output, shape index: {}]
  %s10 = sld [smem:[#allocation0]]
  $region81: #{byol_loss.1} parent=0
    _
  %s12 = ssub.s32 1, %s10
  %s13 = scalar_select 0, %s12, %s10
  $region1: #{byol_loss.1} parent=0
    #allocation3 [shape = 'u8[491520]{0}', space=vmem, size = 0x78000, scoped, tag = 'input window, operand 5']
    #allocation4 [shape = 's32[2]{0}', space=sflag, size = 0x8, scoped, tag = 'scoped memory for byol_loss.1']
    #allocation5 [shape = 's32[2]{0}', space=sflag, size = 0x8, scoped, tag = 'scoped memory for byol_loss.1']
    #allocation6 [shape = 'u8[512]{0}', space=smem, size = 0x200, scoped, tag = 'output window, operand 0, single buffered']
    %14 = vsyncpa [#allocation4], 0
    %s15 = scalar_lea.sflag [#allocation4], 1
    %16 = vsyncpa %s15, 0
    %17 = vsyncpa [#allocation5], 0
    loop: start=0, step=1, limit=5
    $region2: #{byol_loss.1} parent=1 // loop_pre_header
      _
    $region3: #{byol_loss.1} parent=1 // loop_header
      %s19 = sphi 0, %s23
      %p20 = scmp.ge.s32.totalorder %s19, 5
      %s27 = sphi 0, %s27
      %s29 = sphi 0, %s27
      %s30 = sphi 0, %s29
      %s44 = sphi 0, %s30
      %s50 = sphi 0, %s52
      %s53 = sphi 0, %s50
      %s54 = sphi 0, %s53
      %s70 = sphi 0, %s54
      %s76 = sphi 0, %s78
      %s79 = sphi 0, %s76
      %s80 = sphi 0, %s79
      %s96 = sphi 0, %s80
      %s102 = sphi 0, %s104
      %s105 = sphi 0, %s102
      %s106 = sphi 0, %s105
      %s122 = sphi 0, %s106
      %s128 = sphi 0, %s130
      %s131 = sphi 0, %s128
      %s132 = sphi 0, %s131
      %s148 = sphi 0, %s132
      %s154 = sphi 0, %s156
      %s157 = sphi 0, %s154
      %s158 = sphi 0, %s157
      %s174 = sphi 0, %s158
      %s180 = sphi 0, %s182
      %s183 = sphi 0, %s180
      %s184 = sphi 0, %s183
      %s200 = sphi 0, %s184
      %s206 = sphi 0, %s208
      %s209 = sphi 0, %s206
      %s210 = sphi 0, %s209
      %s226 = sphi 0, %s210
      %s232 = sphi 0, %s234
      %s235 = sphi 0, %s232
      %s236 = sphi 0, %s235
      %s252 = sphi 0, %s236
      %s256 = sphi 0, %s256
      %s258 = sphi 0, %s256
      %s259 = sphi 0, %s258
      %s273 = sphi 0, %s259
    $region4: #{byol_loss.1} parent=1 // loop_header_branch
      %22 = sbr.rel (%p20) target = $region8
    $region5: #{byol_loss.1} parent=1 // loop_body
      %s24 = ssub.s32 %s19, 1
      %s25 = ssub.s32 %s19, 2
      %s26 = sadd.s32 %s19, 1
      %s28 = sadd.s32 %s27, 1
      %p31 = scmp.eq.s32.totalorder %s19, 2
      %p32 = scmp.ne.s32.totalorder %s27, %s29
      %p33 = scmp.eq.s32.totalorder %s19, 0
      %p34 = por %p32, %p33
      %p35 = scmp.ne.s32.totalorder %s27, %s29
      %p36 = scmp.eq.s32.totalorder %s24, 2
      %p37 = por %p35, %p36
      %p38 = scmp.ne.s32.totalorder %s29, %s30
      %p39 = scmp.eq.s32.totalorder %s24, 0
      %p40 = por %p38, %p39
      %p41 = scmp.ne.s32.totalorder %s29, %s30
      %p42 = scmp.eq.s32.totalorder %s25, 2
      %p43 = por %p41, %p42
      %p45 = scmp.ne.s32.totalorder %s30, %s44
      %p46 = scmp.eq.s32.totalorder %s25, 0
      %p47 = por %p45, %p46
      %s48 = ssub.s32 %s19, %s26
      %p49 = scmp.eq.s32.totalorder %s48, 0
      %s51 = sadd.s32 %s50, 1
      %s52 = scalar_select %p49, %s50, %s51
      %p55 = pneg %p49
      %p56 = scmp.eq.s32.totalorder %s19, 2
      %p57 = por %p55, %p56
      %p58 = scmp.ne.s32.totalorder %s50, %s53
      %p59 = scmp.eq.s32.totalorder %s19, 0
      %p60 = por %p58, %p59
      %p61 = scmp.ne.s32.totalorder %s50, %s53
      %p62 = scmp.eq.s32.totalorder %s24, 2
      %p63 = por %p61, %p62
      %p64 = scmp.ne.s32.totalorder %s53, %s54
      %p65 = scmp.eq.s32.totalorder %s24, 0
      %p66 = por %p64, %p65
      %p67 = scmp.ne.s32.totalorder %s53, %s54
      %p68 = scmp.eq.s32.totalorder %s25, 2
      %p69 = por %p67, %p68
      %p71 = scmp.ne.s32.totalorder %s54, %s70
      %p72 = scmp.eq.s32.totalorder %s25, 0
      %p73 = por %p71, %p72
      %s74 = ssub.s32 %s19, %s26
      %p75 = scmp.eq.s32.totalorder %s74, 0
      %s77 = sadd.s32 %s76, 1
      %s78 = scalar_select %p75, %s76, %s77
      %p81 = pneg %p75
      %p82 = scmp.eq.s32.totalorder %s19, 2
      %p83 = por %p81, %p82
      %p84 = scmp.ne.s32.totalorder %s76, %s79
      %p85 = scmp.eq.s32.totalorder %s19, 0
      %p86 = por %p84, %p85
      %p87 = scmp.ne.s32.totalorder %s76, %s79
      %p88 = scmp.eq.s32.totalorder %s24, 2
      %p89 = por %p87, %p88
      %p90 = scmp.ne.s32.totalorder %s79, %s80
      %p91 = scmp.eq.s32.totalorder %s24, 0
      %p92 = por %p90, %p91
      %p93 = scmp.ne.s32.totalorder %s79, %s80
      %p94 = scmp.eq.s32.totalorder %s25, 2
      %p95 = por %p93, %p94
      %p97 = scmp.ne.s32.totalorder %s80, %s96
      %p98 = scmp.eq.s32.totalorder %s25, 0
      %p99 = por %p97, %p98
      %s100 = ssub.s32 %s19, %s26
      %p101 = scmp.eq.s32.totalorder %s100, 0
      %s103 = sadd.s32 %s102, 1
      %s104 = scalar_select %p101, %s102, %s103
      %p107 = pneg %p101
      %p108 = scmp.eq.s32.totalorder %s19, 2
      %p109 = por %p107, %p108
      %p110 = scmp.ne.s32.totalorder %s102, %s105
      %p111 = scmp.eq.s32.totalorder %s19, 0
      %p112 = por %p110, %p111
      %p113 = scmp.ne.s32.totalorder %s102, %s105
      %p114 = scmp.eq.s32.totalorder %s24, 2
      %p115 = por %p113, %p114
      %p116 = scmp.ne.s32.totalorder %s105, %s106
      %p117 = scmp.eq.s32.totalorder %s24, 0
      %p118 = por %p116, %p117
      %p119 = scmp.ne.s32.totalorder %s105, %s106
      %p120 = scmp.eq.s32.totalorder %s25, 2
      %p121 = por %p119, %p120
      %p123 = scmp.ne.s32.totalorder %s106, %s122
      %p124 = scmp.eq.s32.totalorder %s25, 0
      %p125 = por %p123, %p124
      %s126 = ssub.s32 %s19, %s26
      %p127 = scmp.eq.s32.totalorder %s126, 0
      %s129 = sadd.s32 %s128, 1
      %s130 = scalar_select %p127, %s128, %s129
      %p133 = pneg %p127
      %p134 = scmp.eq.s32.totalorder %s19, 2
      %p135 = por %p133, %p134
      %p136 = scmp.ne.s32.totalorder %s128, %s131
      %p137 = scmp.eq.s32.totalorder %s19, 0
      %p138 = por %p136, %p137
      %p139 = scmp.ne.s32.totalorder %s128, %s131
      %p140 = scmp.eq.s32.totalorder %s24, 2
      %p141 = por %p139, %p140
      %p142 = scmp.ne.s32.totalorder %s131, %s132
      %p143 = scmp.eq.s32.totalorder %s24, 0
      %p144 = por %p142, %p143
      %p145 = scmp.ne.s32.totalorder %s131, %s132
      %p146 = scmp.eq.s32.totalorder %s25, 2
      %p147 = por %p145, %p146
      %p149 = scmp.ne.s32.totalorder %s132, %s148
      %p150 = scmp.eq.s32.totalorder %s25, 0
      %p151 = por %p149, %p150
      %s152 = ssub.s32 %s19, %s26
      %p153 = scmp.eq.s32.totalorder %s152, 0
      %s155 = sadd.s32 %s154, 1
      %s156 = scalar_select %p153, %s154, %s155
      %p159 = pneg %p153
      %p160 = scmp.eq.s32.totalorder %s19, 2
      %p161 = por %p159, %p160
      %p162 = scmp.ne.s32.totalorder %s154, %s157
      %p163 = scmp.eq.s32.totalorder %s19, 0
      %p164 = por %p162, %p163
      %p165 = scmp.ne.s32.totalorder %s154, %s157
      %p166 = scmp.eq.s32.totalorder %s24, 2
      %p167 = por %p165, %p166
      %p168 = scmp.ne.s32.totalorder %s157, %s158
      %p169 = scmp.eq.s32.totalorder %s24, 0
      %p170 = por %p168, %p169
      %p171 = scmp.ne.s32.totalorder %s157, %s158
      %p172 = scmp.eq.s32.totalorder %s25, 2
      %p173 = por %p171, %p172
      %p175 = scmp.ne.s32.totalorder %s158, %s174
      %p176 = scmp.eq.s32.totalorder %s25, 0
      %p177 = por %p175, %p176
      %s178 = ssub.s32 %s19, %s26
      %p179 = scmp.eq.s32.totalorder %s178, 0
      %s181 = sadd.s32 %s180, 1
      %s182 = scalar_select %p179, %s180, %s181
      %p185 = pneg %p179
      %p186 = scmp.eq.s32.totalorder %s19, 2
      %p187 = por %p185, %p186
      %p188 = scmp.ne.s32.totalorder %s180, %s183
      %p189 = scmp.eq.s32.totalorder %s19, 0
      %p190 = por %p188, %p189
      %p191 = scmp.ne.s32.totalorder %s180, %s183
      %p192 = scmp.eq.s32.totalorder %s24, 2
      %p193 = por %p191, %p192
      %p194 = scmp.ne.s32.totalorder %s183, %s184
      %p195 = scmp.eq.s32.totalorder %s24, 0
      %p196 = por %p194, %p195
      %p197 = scmp.ne.s32.totalorder %s183, %s184
      %p198 = scmp.eq.s32.totalorder %s25, 2
      %p199 = por %p197, %p198
      %p201 = scmp.ne.s32.totalorder %s184, %s200
      %p202 = scmp.eq.s32.totalorder %s25, 0
      %p203 = por %p201, %p202
      %s204 = ssub.s32 %s19, %s26
      %p205 = scmp.eq.s32.totalorder %s204, 0
      %s207 = sadd.s32 %s206, 1
      %s208 = scalar_select %p205, %s206, %s207
      %p211 = pneg %p205
      %p212 = scmp.eq.s32.totalorder %s19, 2
      %p213 = por %p211, %p212
      %p214 = scmp.ne.s32.totalorder %s206, %s209
      %p215 = scmp.eq.s32.totalorder %s19, 0
      %p216 = por %p214, %p215
      %p217 = scmp.ne.s32.totalorder %s206, %s209
      %p218 = scmp.eq.s32.totalorder %s24, 2
      %p219 = por %p217, %p218
      %p220 = scmp.ne.s32.totalorder %s209, %s210
      %p221 = scmp.eq.s32.totalorder %s24, 0
      %p222 = por %p220, %p221
      %p223 = scmp.ne.s32.totalorder %s209, %s210
      %p224 = scmp.eq.s32.totalorder %s25, 2
      %p225 = por %p223, %p224
      %p227 = scmp.ne.s32.totalorder %s210, %s226
      %p228 = scmp.eq.s32.totalorder %s25, 0
      %p229 = por %p227, %p228
      %s230 = ssub.s32 %s19, %s26
      %p231 = scmp.eq.s32.totalorder %s230, 0
      %s233 = sadd.s32 %s232, 1
      %s234 = scalar_select %p231, %s232, %s233
      %p237 = pneg %p231
      %p238 = scmp.eq.s32.totalorder %s19, 2
      %p239 = por %p237, %p238
      %p240 = scmp.ne.s32.totalorder %s232, %s235
      %p241 = scmp.eq.s32.totalorder %s19, 0
      %p242 = por %p240, %p241
      %p243 = scmp.ne.s32.totalorder %s232, %s235
      %p244 = scmp.eq.s32.totalorder %s24, 2
      %p245 = por %p243, %p244
      %p246 = scmp.ne.s32.totalorder %s235, %s236
      %p247 = scmp.eq.s32.totalorder %s24, 0
      %p248 = por %p246, %p247
      %p249 = scmp.ne.s32.totalorder %s235, %s236
      %p250 = scmp.eq.s32.totalorder %s25, 2
      %p251 = por %p249, %p250
      %p253 = scmp.ne.s32.totalorder %s236, %s252
      %p254 = scmp.eq.s32.totalorder %s25, 0
      %p255 = por %p253, %p254
      %s257 = sadd.s32 %s256, 1
      %p260 = scmp.eq.s32.totalorder %s19, 2
      %p261 = scmp.ne.s32.totalorder %s256, %s258
      %p262 = scmp.eq.s32.totalorder %s19, 0
      %p263 = por %p261, %p262
      %p264 = scmp.ne.s32.totalorder %s256, %s258
      %p265 = scmp.eq.s32.totalorder %s24, 2
      %p266 = por %p264, %p265
      %p267 = scmp.ne.s32.totalorder %s258, %s259
      %p268 = scmp.eq.s32.totalorder %s24, 0
      %p269 = por %p267, %p268
      %p270 = scmp.ne.s32.totalorder %s258, %s259
      %p271 = scmp.eq.s32.totalorder %s25, 2
      %p272 = por %p270, %p271
      %p274 = scmp.ne.s32.totalorder %s259, %s273
      %p275 = scmp.eq.s32.totalorder %s25, 0
      %p276 = por %p274, %p275
      %p277 = scmp.le.s32.totalorder 1, %s19
      %p278 = scmp.lt.s32.totalorder %s19, 4
      %p279 = pnand %p277, %p278
      %p280 = pneg %p279
      // Predicated region
      $region9: #{byol_loss.1} parent=5 // pred_check
        _
      $region10: #{byol_loss.1} parent=5 // pred_check_branch
        %282 = sbr.rel (%p279) target = $region12
      $region11: #{byol_loss.1} parent=5 // pred_region
        %s283 = ssub.s32 %s19, 1
        // Predicated region
        $region13: #{byol_loss.1} parent=11 // pred_check
          %p284 = pneg %p40
        $region14: #{byol_loss.1} parent=11 // pred_check_branch
          %286 = sbr.rel (%p284) target = $region16
        $region15: #{byol_loss.1} parent=11 // pred_region
          _
        $region16: #{byol_loss.1} parent=11 // pred_fallthru
          _
      $region12: #{byol_loss.1} parent=5 // pred_fallthru
        _
      %p287 = scmp.lt.s32.totalorder %s19, 3
      // Predicated region
      $region17: #{byol_loss.1} parent=5 // pred_check
        %p288 = pneg %p287
      $region18: #{byol_loss.1} parent=5 // pred_check_branch
        %290 = sbr.rel (%p288) target = $region20
      $region19: #{byol_loss.1} parent=5 // pred_region
        // Predicated region
        $region21: #{byol_loss.1} parent=19 // pred_check
          %p291 = pneg %p60
        $region22: #{byol_loss.1} parent=19 // pred_check_branch
          %293 = sbr.rel (%p291) target = $region24
        $region23: #{byol_loss.1} parent=19 // pred_region
          %p294 = scmp.lt.s32.totalorder %s19, 2
          %s295 = scalar_select %p294, %s19, 2
          %s296 = smul.addr %s295, 12
          %s297 = smul.addr %s296, 4
          %s298 = scalar_lea.vmem %s1, %s297
        $region24: #{byol_loss.1} parent=19 // pred_fallthru
          _
        // Predicated region
        $region25: #{byol_loss.1} parent=19 // pred_check
          %p299 = pneg %p86
        $region26: #{byol_loss.1} parent=19 // pred_check_branch
          %301 = sbr.rel (%p299) target = $region28
        $region27: #{byol_loss.1} parent=19 // pred_region
          %p302 = scmp.lt.s32.totalorder %s19, 2
          %s303 = scalar_select %p302, %s19, 2
          %s304 = smul.addr %s303, 3
          %s305 = scalar_lea.vmem %s2, %s304
        $region28: #{byol_loss.1} parent=19 // pred_fallthru
          _
        // Predicated region
        $region29: #{byol_loss.1} parent=19 // pred_check
          %p306 = pneg %p112
        $region30: #{byol_loss.1} parent=19 // pred_check_branch
          %308 = sbr.rel (%p306) target = $region32
        $region31: #{byol_loss.1} parent=19 // pred_region
          %p309 = scmp.lt.s32.totalorder %s19, 2
          %s310 = scalar_select %p309, %s19, 2
          %s311 = smul.addr %s310, 3
          %s312 = scalar_lea.vmem %s3, %s311
        $region32: #{byol_loss.1} parent=19 // pred_fallthru
          _
        // Predicated region
        $region33: #{byol_loss.1} parent=19 // pred_check
          %p313 = pneg %p138
        $region34: #{byol_loss.1} parent=19 // pred_check_branch
          %315 = sbr.rel (%p313) target = $region36
        $region35: #{byol_loss.1} parent=19 // pred_region
          %p316 = scmp.lt.s32.totalorder %s19, 2
          %s317 = scalar_select %p316, %s19, 2
          %s318 = smul.addr %s317, 3
          %s319 = scalar_lea.vmem %s4, %s318
        $region36: #{byol_loss.1} parent=19 // pred_fallthru
          _
        // Predicated region
        $region37: #{byol_loss.1} parent=19 // pred_check
          %p320 = pneg %p164
        $region38: #{byol_loss.1} parent=19 // pred_check_branch
          %322 = sbr.rel (%p320) target = $region40
        $region39: #{byol_loss.1} parent=19 // pred_region
          %s323 = sand.u32 %s154, 1
          %s324 = scalar_lea.sflag [#allocation4], %s323
          %s325 = sand.u32 %s154, 1
          %s326 = smul.addr %s325, 480
          %s327 = scalar_lea.vmem [#allocation3], %s326
          %s329 = ssub.s32 7680, 7680
          %330 = vsyncadd %s324, %s329
          %s331 = smul.addr %s19, 120
          %s332 = smul.addr %s331, 64
          %s333 = scalar_lea.hbm %s5, %s332
          %s334 = sshll.u32 %s327, 4
          %s335 = int_to_ptr.vmem [resolvable:$true] %s334
          %340 = dma.hbm_to_vmem [thread:$0]  %s333, 7680, %s335, %s324, 192, 192, 12
        $region40: #{byol_loss.1} parent=19 // pred_fallthru
          _
        // Predicated region
        $region41: #{byol_loss.1} parent=19 // pred_check
          %p341 = pneg %p190
        $region42: #{byol_loss.1} parent=19 // pred_check_branch
          %343 = sbr.rel (%p341) target = $region44
        $region43: #{byol_loss.1} parent=19 // pred_region
          %p344 = scmp.lt.s32.totalorder %s19, 2
          %s345 = scalar_select %p344, %s19, 2
          %s346 = smul.addr %s345, 3
          %s347 = scalar_lea.vmem %s6, %s346
        $region44: #{byol_loss.1} parent=19 // pred_fallthru
          _
        // Predicated region
        $region45: #{byol_loss.1} parent=19 // pred_check
          %p348 = pneg %p216
        $region46: #{byol_loss.1} parent=19 // pred_check_branch
          %350 = sbr.rel (%p348) target = $region48
        $region47: #{byol_loss.1} parent=19 // pred_region
          %p351 = scmp.lt.s32.totalorder %s19, 2
          %s352 = scalar_select %p351, %s19, 2
          %s353 = smul.addr %s352, 40
          %s354 = smul.addr %s353, 4
          %s355 = scalar_lea.vmem %s7, %s354
        $region48: #{byol_loss.1} parent=19 // pred_fallthru
          _
        // Predicated region
        $region49: #{byol_loss.1} parent=19 // pred_check
          %p356 = pneg %p242
        $region50: #{byol_loss.1} parent=19 // pred_check_branch
          %358 = sbr.rel (%p356) target = $region52
        $region51: #{byol_loss.1} parent=19 // pred_region
          %p359 = scmp.lt.s32.totalorder %s19, 2
          %s360 = scalar_select %p359, %s19, 2
          %s361 = scalar_lea.vmem %s8, %s360
        $region52: #{byol_loss.1} parent=19 // pred_fallthru
          _
      $region20: #{byol_loss.1} parent=5 // pred_fallthru
        _
      %p362 = scmp.le.s32.totalorder 1, %s19
      %p363 = scmp.lt.s32.totalorder %s19, 4
      %p364 = pnand %p362, %p363
      %p365 = pneg %p364
      // Predicated region
      $region53: #{byol_loss.1} parent=5 // pred_check
        _
      $region54: #{byol_loss.1} parent=5 // pred_check_branch
        %367 = sbr.rel (%p364) target = $region56
      $region55: #{byol_loss.1} parent=5 // pred_region
        %s368 = ssub.s32 %s19, 1
        %s369 = sand.u32 %s157, 1
        %s370 = scalar_lea.sflag [#allocation4], %s369
        %s371 = sand.u32 %s157, 1
        %s372 = smul.addr %s371, 480
        %s373 = scalar_lea.vmem [#allocation3], %s372
        // Predicated region
        $region57: #{byol_loss.1} parent=55 // pred_check
          %p374 = pneg %p170
        $region58: #{byol_loss.1} parent=55 // pred_check_branch
          %376 = sbr.rel (%p374) target = $region60
        $region59: #{byol_loss.1} parent=55 // pred_region
          %377 = dma.done %s370, 7680
        $region60: #{byol_loss.1} parent=55 // pred_fallthru
          _
        %p378 = pneg %p40
        %p379 = pneg %p37
        %p380 = scmp.lt.s32.totalorder %s24, 2
        %s381 = scalar_select %p380, %s24, 2
        %s382 = smul.addr %s381, 12
        %s383 = smul.addr %s382, 4
        %s384 = scalar_lea.vmem %s1, %s383
        %p385 = pneg %p66
        %p386 = pneg %p63
        %p387 = scmp.lt.s32.totalorder %s24, 2
        %s388 = scalar_select %p387, %s24, 2
        %s389 = smul.addr %s388, 3
        %s390 = scalar_lea.vmem %s2, %s389
        %p391 = pneg %p92
        %p392 = pneg %p89
        %p393 = scmp.lt.s32.totalorder %s24, 2
        %s394 = scalar_select %p393, %s24, 2
        %s395 = smul.addr %s394, 3
        %s396 = scalar_lea.vmem %s3, %s395
        %p397 = pneg %p118
        %p398 = pneg %p115
        %p399 = scmp.lt.s32.totalorder %s24, 2
        %s400 = scalar_select %p399, %s24, 2
        %s401 = smul.addr %s400, 3
        %s402 = scalar_lea.vmem %s4, %s401
        %p403 = pneg %p144
        %p404 = pneg %p141
        %s405 = sand.u32 %s157, 1
        %s406 = scalar_lea.sflag [#allocation4], %s405
        %s407 = sand.u32 %s157, 1
        %s408 = smul.addr %s407, 480
        %s409 = scalar_lea.vmem [#allocation3], %s408
        %p410 = pneg %p170
        %p411 = pneg %p167
        %p412 = scmp.lt.s32.totalorder %s24, 2
        %s413 = scalar_select %p412, %s24, 2
        %s414 = smul.addr %s413, 3
        %s415 = scalar_lea.vmem %s6, %s414
        %p416 = pneg %p196
        %p417 = pneg %p193
        %p418 = scmp.lt.s32.totalorder %s24, 2
        %s419 = scalar_select %p418, %s24, 2
        %s420 = smul.addr %s419, 40
        %s421 = smul.addr %s420, 4
        %s422 = scalar_lea.vmem %s7, %s421
        %p423 = pneg %p222
        %p424 = pneg %p219
        %p425 = scmp.lt.s32.totalorder %s24, 2
        %s426 = scalar_select %p425, %s24, 2
        %s427 = scalar_lea.vmem %s8, %s426
        %p428 = pneg %p248
        %p429 = pneg %p245
        %p430 = pneg %p269
        %p431 = pneg %p266
        %p432 = scmp.lt.s32.totalorder %s24, 2
        %s433 = scalar_select %p432, %s24, 2
        %s434 = smul.addr %s433, 12
        %s435 = smul.addr %s434, 4
        %s436 = scalar_lea.vmem %s1, %s435
        %p437 = scmp.lt.s32.totalorder %s24, 2
        %s438 = scalar_select %p437, %s24, 2
        %s439 = smul.addr %s438, 3
        %s440 = scalar_lea.vmem %s2, %s439
        %p441 = scmp.lt.s32.totalorder %s24, 2
        %s442 = scalar_select %p441, %s24, 2
        %s443 = smul.addr %s442, 3
        %s444 = scalar_lea.vmem %s3, %s443
        %p445 = scmp.lt.s32.totalorder %s24, 2
        %s446 = scalar_select %p445, %s24, 2
        %s447 = smul.addr %s446, 3
        %s448 = scalar_lea.vmem %s4, %s447
        %p449 = scmp.lt.s32.totalorder %s24, 2
        %s450 = scalar_select %p449, %s24, 2
        %s451 = smul.addr %s450, 3
        %s452 = scalar_lea.vmem %s6, %s451
        %p453 = scmp.lt.s32.totalorder %s24, 2
        %s454 = scalar_select %p453, %s24, 2
        %s455 = smul.addr %s454, 40
        %s456 = smul.addr %s455, 4
        %s457 = scalar_lea.vmem %s7, %s456
        %p458 = scmp.lt.s32.totalorder %s24, 2
        %s459 = scalar_select %p458, %s24, 2
        %s460 = scalar_lea.vmem %s8, %s459
        %p462 = scmp.eq.s32.totalorder %s24, 0
        // Predicated region
        $region61: #{byol_loss.1} parent=55 // pred_check
          %p463 = pneg %p462
        $region62: #{byol_loss.1} parent=55 // pred_check_branch
          %465 = sbr.rel (%p463) target = $region64
        $region63: #{byol_loss.1} parent=55 // pred_region
          %v466 = vld [vmem:[%s0] sm:$0xff]
          %v467 = vld [vmem:[%s0 + $0x8] sm:$0xff]
          %vm468 = vcmask 261120
          %469 = vst.msk [vmem:[#allocation2] sm:$0xff] %vm468, %v466
          %470 = vst.msk [vmem:[#allocation2 + $0x8] sm:$0xff] %vm468, %v467
        $region64: #{byol_loss.1} parent=55 // pred_fallthru
          _
        %v471 = vld [vmem:[#allocation2] sm:$0xff]
        %v472 = vld [vmem:[#allocation2 + $0x8] sm:$0xff]
        %v473 = vpack.c.bf16 %v472, %v471
        %v474 = vld [vmem:[%s436] sm:$0xff]
        %v475 = vld [vmem:[%s436 + $0x8] sm:$0xf]
        %v476 = vld [vmem:[%s436 + $0xc] sm:$0xff]
        %v477 = vld [vmem:[%s436 + $0x14] sm:$0xf]
        %v478 = vld [vmem:[%s436 + $0x18] sm:$0xff]
        %v479 = vld [vmem:[%s436 + $0x20] sm:$0xf]
        %v480 = vld [vmem:[%s436 + $0x24] sm:$0xff]
        %v481 = vld [vmem:[%s436 + $0x2c] sm:$0xf]
        %v482 = vld [vmem:[%s440] sm:$0x7]
        %v484 = vlaneseq
        %v485 = vshrl.u32 %v484, 7
        %v486 = vsub.s32 0, %v485
        %v487 = vrot.slane %v482, %v486
        %v488 = vlaneseq
        %v489 = vshrl.u32 %v488, 7
        %v490 = vsub.s32 1, %v489
        %v491 = vrot.slane %v482, %v490
        %v492 = vlaneseq
        %v493 = vshrl.u32 %v492, 7
        %v494 = vsub.s32 2, %v493
        %v495 = vrot.slane %v482, %v494
        %v507 = vunpack.c.l.b16 %v474
        %v508 = vunpack.c.h.b16 %v474
        %v509 = vunpack.c.l.b16 %v475
        %v510 = vunpack.c.l.b16 %v476
        %v511 = vunpack.c.h.b16 %v476
        %v512 = vunpack.c.l.b16 %v477
        %v513 = vunpack.c.l.b16 %v478
        %v514 = vunpack.c.h.b16 %v478
        %v515 = vunpack.c.l.b16 %v479
        %v516 = vunpack.c.l.b16 %v480
        %v517 = vunpack.c.h.b16 %v480
        %v518 = vunpack.c.l.b16 %v481
        %v519 = vpack.c.b16 %v510, %v507
        %v520 = vpack.c.b16 %v511, %v508
        %v521 = vpack.c.b16 %v512, %v509
        %v522 = vpack.c.b16 %v516, %v513
        %v523 = vpack.c.b16 %v517, %v514
        %v524 = vpack.c.b16 %v518, %v515
        %vm531 = vcmask 261120
        %v533 = vsel %vm531, %v473, 0
        %535 = vmatprep.subr.bf16.mxu0 %v520
        %536 = vmatpush1.bf16.msra.mxu0 %v519
        %537 = vmatprep.subr.bf16.mxu0 %v523
        %538 = vmatpush1.bf16.msra.mxu0 %v522
        %539 = vmatprep.subr.bf16.mxu0 0
        %540 = vmatpush1.bf16.msra.mxu0 0
        %541 = vmatprep.subr.bf16.mxu0 0
        %542 = vmatpush1.bf16.msra.mxu0 0
        %543 = vmatprep.subr.bf16.mxu0 0
        %544 = vmatpush1.bf16.msra.mxu0 0
        %545 = vmatprep.subr.bf16.mxu0 0
        %546 = vmatpush1.bf16.msra.mxu0 0
        %547 = vmatprep.subr.bf16.mxu0 0
        %548 = vmatpush1.bf16.msra.mxu0 0
        %549 = vmatprep.subr.bf16.mxu0 0
        %550 = vmatpush1.bf16.msra.mxu0 0
        %551 = vmatprep.subr.bf16.mxu0 0
        %552 = vmatpush1.bf16.msra.mxu0 0
        %553 = vmatprep.subr.bf16.mxu0 0
        %554 = vmatpush1.bf16.msra.mxu0 0
        %555 = vmatprep.subr.bf16.mxu0 0
        %556 = vmatpush1.bf16.msra.mxu0 0
        %557 = vmatprep.subr.bf16.mxu0 0
        %558 = vmatpush1.bf16.msra.mxu0 0
        %559 = vmatprep.subr.bf16.mxu0 0
        %560 = vmatpush1.bf16.msra.mxu0 0
        %561 = vmatprep.subr.bf16.mxu0 0
        %562 = vmatpush1.bf16.msra.mxu0 0
        %563 = vmatprep.subr.bf16.mxu0 0
        %564 = vmatpush1.bf16.msra.mxu0 0
        %565 = vmatprep.subr.bf16.mxu0 0
        %566 = vmatpush1.bf16.msra.mxu0 0
        %567 = vmatprep.mubr.bf16.mxu0 0
        %568 = vmatmul.mubr.bf16.gmra.mrb[0].mxu0 %v533
        %v569 = vpop.f32.mrb[0].mxu0
        %v570 = vadd.f32 %v487, %v569
        %v571 = vpop.f32.mrb[0].mxu0
        %v572 = vadd.f32 %v491, %v571
        %v573 = vpop.f32.mrb[0].mxu0
        %v574 = vadd.f32 %v487, %v573
        %v575 = vpop.f32.mrb[0].mxu0
        %v576 = vadd.f32 %v491, %v575
        %577 = vdwg.mxu0
        %578 = vmatprep.subr.bf16.mxu0 0
        %579 = vmatpush1.bf16.msra.mxu0 %v521
        %580 = vmatprep.subr.bf16.mxu0 0
        %581 = vmatpush1.bf16.msra.mxu0 %v524
        %582 = vmatprep.subr.bf16.mxu0 0
        %583 = vmatpush1.bf16.msra.mxu0 0
        %584 = vmatprep.subr.bf16.mxu0 0
        %585 = vmatpush1.bf16.msra.mxu0 0
        %586 = vmatprep.subr.bf16.mxu0 0
        %587 = vmatpush1.bf16.msra.mxu0 0
        %588 = vmatprep.subr.bf16.mxu0 0
        %589 = vmatpush1.bf16.msra.mxu0 0
        %590 = vmatprep.subr.bf16.mxu0 0
        %591 = vmatpush1.bf16.msra.mxu0 0
        %592 = vmatprep.subr.bf16.mxu0 0
        %593 = vmatpush1.bf16.msra.mxu0 0
        %594 = vmatprep.subr.bf16.mxu0 0
        %595 = vmatpush1.bf16.msra.mxu0 0
        %596 = vmatprep.subr.bf16.mxu0 0
        %597 = vmatpush1.bf16.msra.mxu0 0
        %598 = vmatprep.subr.bf16.mxu0 0
        %599 = vmatpush1.bf16.msra.mxu0 0
        %600 = vmatprep.subr.bf16.mxu0 0
        %601 = vmatpush1.bf16.msra.mxu0 0
        %602 = vmatprep.subr.bf16.mxu0 0
        %603 = vmatpush1.bf16.msra.mxu0 0
        %604 = vmatprep.subr.bf16.mxu0 0
        %605 = vmatpush1.bf16.msra.mxu0 0
        %606 = vmatprep.subr.bf16.mxu0 0
        %607 = vmatpush1.bf16.msra.mxu0 0
        %608 = vmatprep.subr.bf16.mxu0 0
        %609 = vmatpush1.bf16.msra.mxu0 0
        %610 = vmatprep.mubr.bf16.mxu0 0
        %611 = vmatmul.mubr.bf16.gmra.mrb[0].mxu0 %v533
        %v612 = vpop.f32.mrb[0].mxu0
        %v613 = vadd.f32 %v495, %v612
        %v614 = vpop.f32.mrb[0].mxu0
        %v615 = vpop.f32.mrb[0].mxu0
        %v616 = vadd.f32 %v495, %v615
        %v617 = vpop.f32.mrb[0].mxu0
        %618 = vdwg.mxu0
        %v619 = vrot.slane %v570, 4
        %v620 = vadd.f32 %v570, %v619
        %v621 = vrot.slane %v620, 2
        %v622 = vadd.f32 %v620, %v621
        %v623 = vrot.slane %v622, 1
        %v624 = vadd.f32 %v622, %v623
        %v625 = vrot.slane %v572, 4
        %v626 = vadd.f32 %v572, %v625
        %v627 = vrot.slane %v626, 2
        %v628 = vadd.f32 %v626, %v627
        %v629 = vrot.slane %v628, 1
        %v630 = vadd.f32 %v628, %v629
        %vm631 = vcmask 523264
        %v632 = vsel %vm631, %v613, 0.0
        %v633 = vrot.slane %v632, 4
        %v634 = vadd.f32 %v632, %v633
        %v635 = vrot.slane %v634, 2
        %v636 = vadd.f32 %v634, %v635
        %v637 = vrot.slane %v636, 1
        %v638 = vadd.f32 %v636, %v637
        %v639 = vrcp.pop 8.0
        %v640 = vmul.f32 %v624, %v639
        %v641 = vmul.f32 %v630, %v639
        %v642 = vmul.f32 %v638, %v639
        %v643 = vmul.f32 %v570, %v570
        %v644 = vmul.f32 %v572, %v572
        %v645 = vmul.f32 %v613, %v613
        %v646 = vrot.slane %v643, 4
        %v647 = vadd.f32 %v643, %v646
        %v648 = vrot.slane %v647, 2
        %v649 = vadd.f32 %v647, %v648
        %v650 = vrot.slane %v649, 1
        %v651 = vadd.f32 %v649, %v650
        %v652 = vrot.slane %v644, 4
        %v653 = vadd.f32 %v644, %v652
        %v654 = vrot.slane %v653, 2
        %v655 = vadd.f32 %v653, %v654
        %v656 = vrot.slane %v655, 1
        %v657 = vadd.f32 %v655, %v656
        %v658 = vsel %vm631, %v645, 0.0
        %v659 = vrot.slane %v658, 4
        %v660 = vadd.f32 %v658, %v659
        %v661 = vrot.slane %v660, 2
        %v662 = vadd.f32 %v660, %v661
        %v663 = vrot.slane %v662, 1
        %v664 = vadd.f32 %v662, %v663
        %v665 = vmul.f32 %v651, %v639
        %v666 = vmul.f32 %v657, %v639
        %v667 = vmul.f32 %v664, %v639
        %v668 = vmul.f32 %v640, %v640
        %v669 = vmul.f32 %v641, %v641
        %v670 = vmul.f32 %v642, %v642
        %v671 = vsub.f32 %v665, %v668
        %v672 = vsub.f32 %v666, %v669
        %v673 = vsub.f32 %v667, %v670
        %v674 = vmax.f32 %v671, 0.0
        %v675 = vmax.f32 %v672, 0.0
        %v676 = vmax.f32 %v673, 0.0
        %v677 = vsub.f32 %v570, %v640
        %v678 = vsub.f32 %v572, %v641
        %v679 = vsub.f32 %v613, %v642
        %v680 = vadd.f32 %v674, 1e-05
        %v681 = vadd.f32 %v675, 1e-05
        %v682 = vadd.f32 %v676, 1e-05
        %v683 = vrsqrt.pop %v680
        %v684 = vrsqrt.pop %v681
        %v685 = vrsqrt.pop %v682
        %v686 = vmul.f32 %v677, %v683
        %v687 = vmul.f32 %v678, %v684
        %v688 = vmul.f32 %v679, %v685
        %v689 = vrot.slane %v574, 4
        %v690 = vadd.f32 %v574, %v689
        %v691 = vrot.slane %v690, 2
        %v692 = vadd.f32 %v690, %v691
        %v693 = vrot.slane %v692, 1
        %v694 = vadd.f32 %v692, %v693
        %v695 = vrot.slane %v576, 4
        %v696 = vadd.f32 %v576, %v695
        %v697 = vrot.slane %v696, 2
        %v698 = vadd.f32 %v696, %v697
        %v699 = vrot.slane %v698, 1
        %v700 = vadd.f32 %v698, %v699
        %v701 = vsel %vm631, %v616, 0.0
        %v702 = vrot.slane %v701, 4
        %v703 = vadd.f32 %v701, %v702
        %v704 = vrot.slane %v703, 2
        %v705 = vadd.f32 %v703, %v704
        %v706 = vrot.slane %v705, 1
        %v707 = vadd.f32 %v705, %v706
        %v708 = vmul.f32 %v694, %v639
        %v709 = vmul.f32 %v700, %v639
        %v710 = vmul.f32 %v707, %v639
        %v711 = vmul.f32 %v574, %v574
        %v712 = vmul.f32 %v576, %v576
        %v713 = vmul.f32 %v616, %v616
        %v714 = vrot.slane %v711, 4
        %v715 = vadd.f32 %v711, %v714
        %v716 = vrot.slane %v715, 2
        %v717 = vadd.f32 %v715, %v716
        %v718 = vrot.slane %v717, 1
        %v719 = vadd.f32 %v717, %v718
        %v720 = vrot.slane %v712, 4
        %v721 = vadd.f32 %v712, %v720
        %v722 = vrot.slane %v721, 2
        %v723 = vadd.f32 %v721, %v722
        %v724 = vrot.slane %v723, 1
        %v725 = vadd.f32 %v723, %v724
        %v726 = vsel %vm631, %v713, 0.0
        %v727 = vrot.slane %v726, 4
        %v728 = vadd.f32 %v726, %v727
        %v729 = vrot.slane %v728, 2
        %v730 = vadd.f32 %v728, %v729
        %v731 = vrot.slane %v730, 1
        %v732 = vadd.f32 %v730, %v731
        %v733 = vmul.f32 %v719, %v639
        %v734 = vmul.f32 %v725, %v639
        %v735 = vmul.f32 %v732, %v639
        %v736 = vmul.f32 %v708, %v708
        %v737 = vmul.f32 %v709, %v709
        %v738 = vmul.f32 %v710, %v710
        %v739 = vsub.f32 %v733, %v736
        %v740 = vsub.f32 %v734, %v737
        %v741 = vsub.f32 %v735, %v738
        %v742 = vmax.f32 %v739, 0.0
        %v743 = vmax.f32 %v740, 0.0
        %v744 = vmax.f32 %v741, 0.0
        %v745 = vsub.f32 %v574, %v708
        %v746 = vsub.f32 %v576, %v709
        %v747 = vsub.f32 %v616, %v710
        %v748 = vadd.f32 %v742, 1e-05
        %v749 = vadd.f32 %v743, 1e-05
        %v750 = vadd.f32 %v744, 1e-05
        %v751 = vrsqrt.pop %v748
        %v752 = vrsqrt.pop %v749
        %v753 = vrsqrt.pop %v750
        %v754 = vmul.f32 %v745, %v751
        %v755 = vmul.f32 %v746, %v752
        %v756 = vmul.f32 %v747, %v753
        %v757 = vld [vmem:[%s444] sm:$0x7]
        %v759 = vlaneseq
        %v760 = vshrl.u32 %v759, 7
        %v761 = vsub.s32 0, %v760
        %v762 = vrot.slane %v757, %v761
        %v763 = vlaneseq
        %v764 = vshrl.u32 %v763, 7
        %v765 = vsub.s32 1, %v764
        %v766 = vrot.slane %v757, %v765
        %v767 = vlaneseq
        %v768 = vshrl.u32 %v767, 7
        %v769 = vsub.s32 2, %v768
        %v770 = vrot.slane %v757, %v769
        %v774 = vmul.f32 %v686, %v762
        %v775 = vmul.f32 %v687, %v766
        %v776 = vmul.f32 %v688, %v770
        %v777 = vmul.f32 %v754, %v762
        %v778 = vmul.f32 %v755, %v766
        %v779 = vmul.f32 %v756, %v770
        %v780 = vld [vmem:[%s448] sm:$0x7]
        %v782 = vlaneseq
        %v783 = vshrl.u32 %v782, 7
        %v784 = vsub.s32 0, %v783
        %v785 = vrot.slane %v780, %v784
        %v786 = vlaneseq
        %v787 = vshrl.u32 %v786, 7
        %v788 = vsub.s32 1, %v787
        %v789 = vrot.slane %v780, %v788
        %v790 = vlaneseq
        %v791 = vshrl.u32 %v790, 7
        %v792 = vsub.s32 2, %v791
        %v793 = vrot.slane %v780, %v792
        %v797 = vadd.f32 %v774, %v785
        %v798 = vadd.f32 %v775, %v789
        %v799 = vadd.f32 %v776, %v793
        %v800 = vadd.f32 %v777, %v785
        %v801 = vadd.f32 %v778, %v789
        %v802 = vadd.f32 %v779, %v793
        %v803 = vmax.f32 %v797, 0.0
        %v804 = vmax.f32 %v798, 0.0
        %v805 = vmax.f32 %v799, 0.0
        %v806 = vmax.f32 %v800, 0.0
        %v807 = vmax.f32 %v801, 0.0
        %v808 = vmax.f32 %v802, 0.0
        %v809 = vpack.c.bf16 %v806, %v803
        %v810 = vpack.c.bf16 %v807, %v804
        %v811 = vpack.c.bf16 %v808, %v805
        %v812 = vld [vmem:[%s373] sm:$0xff]
        %v813 = vld [vmem:[%s373 + $0x8] sm:$0xf]
        %v814 = vld [vmem:[%s373 + $0xc] sm:$0xff]
        %v815 = vld [vmem:[%s373 + $0x14] sm:$0xf]
        %v816 = vld [vmem:[%s373 + $0x18] sm:$0xff]
        %v817 = vld [vmem:[%s373 + $0x20] sm:$0xf]
        %v818 = vld [vmem:[%s373 + $0x24] sm:$0xff]
        %v819 = vld [vmem:[%s373 + $0x2c] sm:$0xf]
        %v820 = vld [vmem:[%s373 + $0x30] sm:$0xff]
        %v821 = vld [vmem:[%s373 + $0x38] sm:$0xf]
        %v822 = vld [vmem:[%s373 + $0x3c] sm:$0xff]
        %v823 = vld [vmem:[%s373 + $0x44] sm:$0xf]
        %v824 = vld [vmem:[%s373 + $0x48] sm:$0xff]
        %v825 = vld [vmem:[%s373 + $0x50] sm:$0xf]
        %v826 = vld [vmem:[%s373 + $0x54] sm:$0xff]
        %v827 = vld [vmem:[%s373 + $0x5c] sm:$0xf]
        %v828 = vld [vmem:[%s373 + $0x60] sm:$0xff]
        %v829 = vld [vmem:[%s373 + $0x68] sm:$0xf]
        %v830 = vld [vmem:[%s373 + $0x6c] sm:$0xff]
        %v831 = vld [vmem:[%s373 + $0x74] sm:$0xf]
        %v832 = vld [vmem:[%s373 + $0x78] sm:$0xff]
        %v833 = vld [vmem:[%s373 + $0x80] sm:$0xf]
        %v834 = vld [vmem:[%s373 + $0x84] sm:$0xff]
        %v835 = vld [vmem:[%s373 + $0x8c] sm:$0xf]
        %v836 = vld [vmem:[%s373 + $0x90] sm:$0xff]
        %v837 = vld [vmem:[%s373 + $0x98] sm:$0xf]
        %v838 = vld [vmem:[%s373 + $0x9c] sm:$0xff]
        %v839 = vld [vmem:[%s373 + $0xa4] sm:$0xf]
        %v840 = vld [vmem:[%s373 + $0xa8] sm:$0xff]
        %v841 = vld [vmem:[%s373 + $0xb0] sm:$0xf]
        %v842 = vld [vmem:[%s373 + $0xb4] sm:$0xff]
        %v843 = vld [vmem:[%s373 + $0xbc] sm:$0xf]
        %v844 = vld [vmem:[%s373 + $0xc0] sm:$0xff]
        %v845 = vld [vmem:[%s373 + $0xc8] sm:$0xf]
        %v846 = vld [vmem:[%s373 + $0xcc] sm:$0xff]
        %v847 = vld [vmem:[%s373 + $0xd4] sm:$0xf]
        %v848 = vld [vmem:[%s373 + $0xd8] sm:$0xff]
        %v849 = vld [vmem:[%s373 + $0xe0] sm:$0xf]
        %v850 = vld [vmem:[%s373 + $0xe4] sm:$0xff]
        %v851 = vld [vmem:[%s373 + $0xec] sm:$0xf]
        %v852 = vld [vmem:[%s373 + $0xf0] sm:$0xff]
        %v853 = vld [vmem:[%s373 + $0xf8] sm:$0xf]
        %v854 = vld [vmem:[%s373 + $0xfc] sm:$0xff]
        %v855 = vld [vmem:[%s373 + $0x104] sm:$0xf]
        %v856 = vld [vmem:[%s373 + $0x108] sm:$0xff]
        %v857 = vld [vmem:[%s373 + $0x110] sm:$0xf]
        %v858 = vld [vmem:[%s373 + $0x114] sm:$0xff]
        %v859 = vld [vmem:[%s373 + $0x11c] sm:$0xf]
        %v860 = vld [vmem:[%s373 + $0x120] sm:$0xff]
        %v861 = vld [vmem:[%s373 + $0x128] sm:$0xf]
        %v862 = vld [vmem:[%s373 + $0x12c] sm:$0xff]
        %v863 = vld [vmem:[%s373 + $0x134] sm:$0xf]
        %v864 = vld [vmem:[%s373 + $0x138] sm:$0xff]
        %v865 = vld [vmem:[%s373 + $0x140] sm:$0xf]
        %v866 = vld [vmem:[%s373 + $0x144] sm:$0xff]
        %v867 = vld [vmem:[%s373 + $0x14c] sm:$0xf]
        %v868 = vld [vmem:[%s373 + $0x150] sm:$0xff]
        %v869 = vld [vmem:[%s373 + $0x158] sm:$0xf]
        %v870 = vld [vmem:[%s373 + $0x15c] sm:$0xff]
        %v871 = vld [vmem:[%s373 + $0x164] sm:$0xf]
        %v872 = vld [vmem:[%s373 + $0x168] sm:$0xff]
        %v873 = vld [vmem:[%s373 + $0x170] sm:$0xf]
        %v874 = vld [vmem:[%s373 + $0x174] sm:$0xff]
        %v875 = vld [vmem:[%s373 + $0x17c] sm:$0xf]
        %v876 = vld [vmem:[%s373 + $0x180] sm:$0xff]
        %v877 = vld [vmem:[%s373 + $0x188] sm:$0xf]
        %v878 = vld [vmem:[%s373 + $0x18c] sm:$0xff]
        %v879 = vld [vmem:[%s373 + $0x194] sm:$0xf]
        %v880 = vld [vmem:[%s373 + $0x198] sm:$0xff]
        %v881 = vld [vmem:[%s373 + $0x1a0] sm:$0xf]
        %v882 = vld [vmem:[%s373 + $0x1a4] sm:$0xff]
        %v883 = vld [vmem:[%s373 + $0x1ac] sm:$0xf]
        %v884 = vld [vmem:[%s373 + $0x1b0] sm:$0xff]
        %v885 = vld [vmem:[%s373 + $0x1b8] sm:$0xf]
        %v886 = vld [vmem:[%s373 + $0x1bc] sm:$0xff]
        %v887 = vld [vmem:[%s373 + $0x1c4] sm:$0xf]
        %v888 = vld [vmem:[%s373 + $0x1c8] sm:$0xff]
        %v889 = vld [vmem:[%s373 + $0x1d0] sm:$0xf]
        %v890 = vld [vmem:[%s373 + $0x1d4] sm:$0xff]
        %v891 = vld [vmem:[%s373 + $0x1dc] sm:$0xf]
        %v892 = vld [vmem:[%s452] sm:$0x7]
        %v894 = vlaneseq
        %v895 = vshrl.u32 %v894, 7
        %v896 = vsub.s32 0, %v895
        %v897 = vrot.slane %v892, %v896
        %v898 = vlaneseq
        %v899 = vshrl.u32 %v898, 7
        %v900 = vsub.s32 1, %v899
        %v901 = vrot.slane %v892, %v900
        %v902 = vlaneseq
        %v903 = vshrl.u32 %v902, 7
        %v904 = vsub.s32 2, %v903
        %v905 = vrot.slane %v892, %v904
        %v989 = vunpack.c.l.b16 %v812
        %v990 = vunpack.c.h.b16 %v812
        %v991 = vunpack.c.l.b16 %v813
        %v992 = vunpack.c.l.b16 %v814
        %v993 = vunpack.c.h.b16 %v814
        %v994 = vunpack.c.l.b16 %v815
        %v995 = vunpack.c.l.b16 %v816
        %v996 = vunpack.c.h.b16 %v816
        %v997 = vunpack.c.l.b16 %v817
        %v998 = vunpack.c.l.b16 %v818
        %v999 = vunpack.c.h.b16 %v818
        %v1000 = vunpack.c.l.b16 %v819
        %v1001 = vunpack.c.l.b16 %v820
        %v1002 = vunpack.c.h.b16 %v820
        %v1003 = vunpack.c.l.b16 %v821
        %v1004 = vunpack.c.l.b16 %v822
        %v1005 = vunpack.c.h.b16 %v822
        %v1006 = vunpack.c.l.b16 %v823
        %v1007 = vunpack.c.l.b16 %v824
        %v1008 = vunpack.c.h.b16 %v824
        %v1009 = vunpack.c.l.b16 %v825
        %v1010 = vunpack.c.l.b16 %v826
        %v1011 = vunpack.c.h.b16 %v826
        %v1012 = vunpack.c.l.b16 %v827
        %v1013 = vunpack.c.l.b16 %v828
        %v1014 = vunpack.c.h.b16 %v828
        %v1015 = vunpack.c.l.b16 %v829
        %v1016 = vunpack.c.l.b16 %v830
        %v1017 = vunpack.c.h.b16 %v830
        %v1018 = vunpack.c.l.b16 %v831
        %v1019 = vunpack.c.l.b16 %v832
        %v1020 = vunpack.c.h.b16 %v832
        %v1021 = vunpack.c.l.b16 %v833
        %v1022 = vunpack.c.l.b16 %v834
        %v1023 = vunpack.c.h.b16 %v834
        %v1024 = vunpack.c.l.b16 %v835
        %v1025 = vunpack.c.l.b16 %v836
        %v1026 = vunpack.c.h.b16 %v836
        %v1027 = vunpack.c.l.b16 %v837
        %v1028 = vunpack.c.l.b16 %v838
        %v1029 = vunpack.c.h.b16 %v838
        %v1030 = vunpack.c.l.b16 %v839
        %v1031 = vunpack.c.l.b16 %v840
        %v1032 = vunpack.c.h.b16 %v840
        %v1033 = vunpack.c.l.b16 %v841
        %v1034 = vunpack.c.l.b16 %v842
        %v1035 = vunpack.c.h.b16 %v842
        %v1036 = vunpack.c.l.b16 %v843
        %v1037 = vunpack.c.l.b16 %v844
        %v1038 = vunpack.c.h.b16 %v844
        %v1039 = vunpack.c.l.b16 %v845
        %v1040 = vunpack.c.l.b16 %v846
        %v1041 = vunpack.c.h.b16 %v846
        %v1042 = vunpack.c.l.b16 %v847
        %v1043 = vunpack.c.l.b16 %v848
        %v1044 = vunpack.c.h.b16 %v848
        %v1045 = vunpack.c.l.b16 %v849
        %v1046 = vunpack.c.l.b16 %v850
        %v1047 = vunpack.c.h.b16 %v850
        %v1048 = vunpack.c.l.b16 %v851
        %v1049 = vunpack.c.l.b16 %v852
        %v1050 = vunpack.c.h.b16 %v852
        %v1051 = vunpack.c.l.b16 %v853
        %v1052 = vunpack.c.l.b16 %v854
        %v1053 = vunpack.c.h.b16 %v854
        %v1054 = vunpack.c.l.b16 %v855
        %v1055 = vunpack.c.l.b16 %v856
        %v1056 = vunpack.c.h.b16 %v856
        %v1057 = vunpack.c.l.b16 %v857
        %v1058 = vunpack.c.l.b16 %v858
        %v1059 = vunpack.c.h.b16 %v858
        %v1060 = vunpack.c.l.b16 %v859
        %v1061 = vunpack.c.l.b16 %v860
        %v1062 = vunpack.c.h.b16 %v860
        %v1063 = vunpack.c.l.b16 %v861
        %v1064 = vunpack.c.l.b16 %v862
        %v1065 = vunpack.c.h.b16 %v862
        %v1066 = vunpack.c.l.b16 %v863
        %v1067 = vunpack.c.l.b16 %v864
        %v1068 = vunpack.c.h.b16 %v864
        %v1069 = vunpack.c.l.b16 %v865
        %v1070 = vunpack.c.l.b16 %v866
        %v1071 = vunpack.c.h.b16 %v866
        %v1072 = vunpack.c.l.b16 %v867
        %v1073 = vunpack.c.l.b16 %v868
        %v1074 = vunpack.c.h.b16 %v868
        %v1075 = vunpack.c.l.b16 %v869
        %v1076 = vunpack.c.l.b16 %v870
        %v1077 = vunpack.c.h.b16 %v870
        %v1078 = vunpack.c.l.b16 %v871
        %v1079 = vunpack.c.l.b16 %v872
        %v1080 = vunpack.c.h.b16 %v872
        %v1081 = vunpack.c.l.b16 %v873
        %v1082 = vunpack.c.l.b16 %v874
        %v1083 = vunpack.c.h.b16 %v874
        %v1084 = vunpack.c.l.b16 %v875
        %v1085 = vunpack.c.l.b16 %v876
        %v1086 = vunpack.c.h.b16 %v876
        %v1087 = vunpack.c.l.b16 %v877
        %v1088 = vunpack.c.l.b16 %v878
        %v1089 = vunpack.c.h.b16 %v878
        %v1090 = vunpack.c.l.b16 %v879
        %v1091 = vunpack.c.l.b16 %v880
        %v1092 = vunpack.c.h.b16 %v880
        %v1093 = vunpack.c.l.b16 %v881
        %v1094 = vunpack.c.l.b16 %v882
        %v1095 = vunpack.c.h.b16 %v882
        %v1096 = vunpack.c.l.b16 %v883
        %v1097 = vunpack.c.l.b16 %v884
        %v1098 = vunpack.c.h.b16 %v884
        %v1099 = vunpack.c.l.b16 %v885
        %v1100 = vunpack.c.l.b16 %v886
        %v1101 = vunpack.c.h.b16 %v886
        %v1102 = vunpack.c.l.b16 %v887
        %v1103 = vunpack.c.l.b16 %v888
        %v1104 = vunpack.c.h.b16 %v888
        %v1105 = vunpack.c.l.b16 %v889
        %v1106 = vunpack.c.l.b16 %v890
        %v1107 = vunpack.c.h.b16 %v890
        %v1108 = vunpack.c.l.b16 %v891
        %v1109 = vpack.c.b16 %v992, %v989
        %v1110 = vpack.c.b16 %v993, %v990
        %v1111 = vpack.c.b16 %v994, %v991
        %v1112 = vpack.c.b16 %v998, %v995
        %v1113 = vpack.c.b16 %v999, %v996
        %v1114 = vpack.c.b16 %v1000, %v997
        %v1115 = vpack.c.b16 %v1004, %v1001
        %v1116 = vpack.c.b16 %v1005, %v1002
        %v1117 = vpack.c.b16 %v1006, %v1003
        %v1118 = vpack.c.b16 %v1010, %v1007
        %v1119 = vpack.c.b16 %v1011, %v1008
        %v1120 = vpack.c.b16 %v1012, %v1009
        %v1121 = vpack.c.b16 %v1016, %v1013
        %v1122 = vpack.c.b16 %v1017, %v1014
        %v1123 = vpack.c.b16 %v1018, %v1015
        %v1124 = vpack.c.b16 %v1022, %v1019
        %v1125 = vpack.c.b16 %v1023, %v1020
        %v1126 = vpack.c.b16 %v1024, %v1021
        %v1127 = vpack.c.b16 %v1028, %v1025
        %v1128 = vpack.c.b16 %v1029, %v1026
        %v1129 = vpack.c.b16 %v1030, %v1027
        %v1130 = vpack.c.b16 %v1034, %v1031
        %v1131 = vpack.c.b16 %v1035, %v1032
        %v1132 = vpack.c.b16 %v1036, %v1033
        %v1133 = vpack.c.b16 %v1040, %v1037
        %v1134 = vpack.c.b16 %v1041, %v1038
        %v1135 = vpack.c.b16 %v1042, %v1039
        %v1136 = vpack.c.b16 %v1046, %v1043
        %v1137 = vpack.c.b16 %v1047, %v1044
        %v1138 = vpack.c.b16 %v1048, %v1045
        %v1139 = vpack.c.b16 %v1052, %v1049
        %v1140 = vpack.c.b16 %v1053, %v1050
        %v1141 = vpack.c.b16 %v1054, %v1051
        %v1142 = vpack.c.b16 %v1058, %v1055
        %v1143 = vpack.c.b16 %v1059, %v1056
        %v1144 = vpack.c.b16 %v1060, %v1057
        %v1145 = vpack.c.b16 %v1064, %v1061
        %v1146 = vpack.c.b16 %v1065, %v1062
        %v1147 = vpack.c.b16 %v1066, %v1063
        %v1148 = vpack.c.b16 %v1070, %v1067
        %v1149 = vpack.c.b16 %v1071, %v1068
        %v1150 = vpack.c.b16 %v1072, %v1069
        %v1151 = vpack.c.b16 %v1076, %v1073
        %v1152 = vpack.c.b16 %v1077, %v1074
        %v1153 = vpack.c.b16 %v1078, %v1075
        %v1154 = vpack.c.b16 %v1082, %v1079
        %v1155 = vpack.c.b16 %v1083, %v1080
        %v1156 = vpack.c.b16 %v1084, %v1081
        %v1157 = vpack.c.b16 %v1088, %v1085
        %v1158 = vpack.c.b16 %v1089, %v1086
        %v1159 = vpack.c.b16 %v1090, %v1087
        %v1160 = vpack.c.b16 %v1094, %v1091
        %v1161 = vpack.c.b16 %v1095, %v1092
        %v1162 = vpack.c.b16 %v1096, %v1093
        %v1163 = vpack.c.b16 %v1100, %v1097
        %v1164 = vpack.c.b16 %v1101, %v1098
        %v1165 = vpack.c.b16 %v1102, %v1099
        %v1166 = vpack.c.b16 %v1106, %v1103
        %v1167 = vpack.c.b16 %v1107, %v1104
        %v1168 = vpack.c.b16 %v1108, %v1105
        %v1230 = vsel %vm631, %v811, 0
        %1232 = vmatprep.subr.bf16.mxu0 %v1110
        %1233 = vmatpush1.bf16.msra.mxu0 %v1109
        %1234 = vmatprep.subr.bf16.mxu0 %v1113
        %1235 = vmatpush1.bf16.msra.mxu0 %v1112
        %1236 = vmatprep.subr.bf16.mxu0 %v1116
        %1237 = vmatpush1.bf16.msra.mxu0 %v1115
        %1238 = vmatprep.subr.bf16.mxu0 %v1119
        %1239 = vmatpush1.bf16.msra.mxu0 %v1118
        %1240 = vmatprep.subr.bf16.mxu0 %v1122
        %1241 = vmatpush1.bf16.msra.mxu0 %v1121
        %1242 = vmatprep.subr.bf16.mxu0 %v1125
        %1243 = vmatpush1.bf16.msra.mxu0 %v1124
        %1244 = vmatprep.subr.bf16.mxu0 %v1128
        %1245 = vmatpush1.bf16.msra.mxu0 %v1127
        %1246 = vmatprep.subr.bf16.mxu0 %v1131
        %1247 = vmatpush1.bf16.msra.mxu0 %v1130
        %1248 = vmatprep.subr.bf16.mxu0 %v1134
        %1249 = vmatpush1.bf16.msra.mxu0 %v1133
        %1250 = vmatprep.subr.bf16.mxu0 %v1137
        %1251 = vmatpush1.bf16.msra.mxu0 %v1136
        %1252 = vmatprep.subr.bf16.mxu0 %v1140
        %1253 = vmatpush1.bf16.msra.mxu0 %v1139
        %1254 = vmatprep.subr.bf16.mxu0 %v1143
        %1255 = vmatpush1.bf16.msra.mxu0 %v1142
        %1256 = vmatprep.subr.bf16.mxu0 %v1146
        %1257 = vmatpush1.bf16.msra.mxu0 %v1145
        %1258 = vmatprep.subr.bf16.mxu0 %v1149
        %1259 = vmatpush1.bf16.msra.mxu0 %v1148
        %1260 = vmatprep.subr.bf16.mxu0 %v1152
        %1261 = vmatpush1.bf16.msra.mxu0 %v1151
        %1262 = vmatprep.subr.bf16.mxu0 %v1155
        %1263 = vmatpush1.bf16.msra.mxu0 %v1154
        %1264 = vmatprep.mubr.bf16.mxu0 %v810
        %1265 = vmatmul.mubr.bf16.gmra.mrb[0].mxu0 %v809
        %v1266 = vpop.f32.mrb[0].mxu0
        %v1267 = vadd.f32 %v897, %v1266
        %v1268 = vpop.f32.mrb[0].mxu0
        %v1269 = vadd.f32 %v901, %v1268
        %v1270 = vpop.f32.mrb[0].mxu0
        %v1271 = vadd.f32 %v897, %v1270
        %v1272 = vpop.f32.mrb[0].mxu0
        %v1273 = vadd.f32 %v901, %v1272
        %1274 = vdwg.mxu0
        %1275 = vmatprep.subr.bf16.mxu0 %v1158
        %1276 = vmatpush1.bf16.msra.mxu0 %v1157
        %1277 = vmatprep.subr.bf16.mxu0 %v1161
        %1278 = vmatpush1.bf16.msra.mxu0 %v1160
        %1279 = vmatprep.subr.bf16.mxu0 %v1164
        %1280 = vmatpush1.bf16.msra.mxu0 %v1163
        %1281 = vmatprep.subr.bf16.mxu0 %v1167
        %1282 = vmatpush1.bf16.msra.mxu0 %v1166
        %1283 = vmatprep.subr.bf16.mxu0 0
        %1284 = vmatpush1.bf16.msra.mxu0 0
        %1285 = vmatprep.subr.bf16.mxu0 0
        %1286 = vmatpush1.bf16.msra.mxu0 0
        %1287 = vmatprep.subr.bf16.mxu0 0
        %1288 = vmatpush1.bf16.msra.mxu0 0
        %1289 = vmatprep.subr.bf16.mxu0 0
        %1290 = vmatpush1.bf16.msra.mxu0 0
        %1291 = vmatprep.subr.bf16.mxu0 0
        %1292 = vmatpush1.bf16.msra.mxu0 0
        %1293 = vmatprep.subr.bf16.mxu0 0
        %1294 = vmatpush1.bf16.msra.mxu0 0
        %1295 = vmatprep.subr.bf16.mxu0 0
        %1296 = vmatpush1.bf16.msra.mxu0 0
        %1297 = vmatprep.subr.bf16.mxu0 0
        %1298 = vmatpush1.bf16.msra.mxu0 0
        %1299 = vmatprep.subr.bf16.mxu0 0
        %1300 = vmatpush1.bf16.msra.mxu0 0
        %1301 = vmatprep.subr.bf16.mxu0 0
        %1302 = vmatpush1.bf16.msra.mxu0 0
        %1303 = vmatprep.subr.bf16.mxu0 0
        %1304 = vmatpush1.bf16.msra.mxu0 0
        %1305 = vmatprep.subr.bf16.mxu0 0
        %1306 = vmatpush1.bf16.msra.mxu0 0
        %1307 = vmatprep.mubr.bf16.mxu0 0
        %1308 = vmatmul.mubr.bf16.gmra.mrb[0].mxu0 %v1230
        %v1309 = vpop.f32.mrb[0].mxu0
        %v1310 = vadd.f32 %v1267, %v1309
        %v1311 = vpop.f32.mrb[0].mxu0
        %v1312 = vadd.f32 %v1269, %v1311
        %v1313 = vpop.f32.mrb[0].mxu0
        %v1314 = vadd.f32 %v1271, %v1313
        %v1315 = vpop.f32.mrb[0].mxu0
        %v1316 = vadd.f32 %v1273, %v1315
        %1317 = vdwg.mxu0
        %1318 = vmatprep.subr.bf16.mxu0 0
        %1319 = vmatpush1.bf16.msra.mxu0 %v1111
        %1320 = vmatprep.subr.bf16.mxu0 0
        %1321 = vmatpush1.bf16.msra.mxu0 %v1114
        %1322 = vmatprep.subr.bf16.mxu0 0
        %1323 = vmatpush1.bf16.msra.mxu0 %v1117
        %1324 = vmatprep.subr.bf16.mxu0 0
        %1325 = vmatpush1.bf16.msra.mxu0 %v1120
        %1326 = vmatprep.subr.bf16.mxu0 0
        %1327 = vmatpush1.bf16.msra.mxu0 %v1123
        %1328 = vmatprep.subr.bf16.mxu0 0
        %1329 = vmatpush1.bf16.msra.mxu0 %v1126
        %1330 = vmatprep.subr.bf16.mxu0 0
        %1331 = vmatpush1.bf16.msra.mxu0 %v1129
        %1332 = vmatprep.subr.bf16.mxu0 0
        %1333 = vmatpush1.bf16.msra.mxu0 %v1132
        %1334 = vmatprep.subr.bf16.mxu0 0
        %1335 = vmatpush1.bf16.msra.mxu0 %v1135
        %1336 = vmatprep.subr.bf16.mxu0 0
        %1337 = vmatpush1.bf16.msra.mxu0 %v1138
        %1338 = vmatprep.subr.bf16.mxu0 0
        %1339 = vmatpush1.bf16.msra.mxu0 %v1141
        %1340 = vmatprep.subr.bf16.mxu0 0
        %1341 = vmatpush1.bf16.msra.mxu0 %v1144
        %1342 = vmatprep.subr.bf16.mxu0 0
        %1343 = vmatpush1.bf16.msra.mxu0 %v1147
        %1344 = vmatprep.subr.bf16.mxu0 0
        %1345 = vmatpush1.bf16.msra.mxu0 %v1150
        %1346 = vmatprep.subr.bf16.mxu0 0
        %1347 = vmatpush1.bf16.msra.mxu0 %v1153
        %1348 = vmatprep.subr.bf16.mxu0 0
        %1349 = vmatpush1.bf16.msra.mxu0 %v1156
        %1350 = vmatprep.mubr.bf16.mxu0 %v810
        %1351 = vmatmul.mubr.bf16.gmra.mrb[0].mxu0 %v809
        %v1352 = vpop.f32.mrb[0].mxu0
        %v1353 = vadd.f32 %v905, %v1352
        %v1354 = vpop.f32.mrb[0].mxu0
        %v1355 = vpop.f32.mrb[0].mxu0
        %v1356 = vadd.f32 %v905, %v1355
        %v1357 = vpop.f32.mrb[0].mxu0
        %1358 = vdwg.mxu0
        %1359 = vmatprep.subr.bf16.mxu0 0
        %1360 = vmatpush1.bf16.msra.mxu0 %v1159
        %1361 = vmatprep.subr.bf16.mxu0 0
        %1362 = vmatpush1.bf16.msra.mxu0 %v1162
        %1363 = vmatprep.subr.bf16.mxu0 0
        %1364 = vmatpush1.bf16.msra.mxu0 %v1165
        %1365 = vmatprep.subr.bf16.mxu0 0
        %1366 = vmatpush1.bf16.msra.mxu0 %v1168
        %1367 = vmatprep.subr.bf16.mxu0 0
        %1368 = vmatpush1.bf16.msra.mxu0 0
        %1369 = vmatprep.subr.bf16.mxu0 0
        %1370 = vmatpush1.bf16.msra.mxu0 0
        %1371 = vmatprep.subr.bf16.mxu0 0
        %1372 = vmatpush1.bf16.msra.mxu0 0
        %1373 = vmatprep.subr.bf16.mxu0 0
        %1374 = vmatpush1.bf16.msra.mxu0 0
        %1375 = vmatprep.subr.bf16.mxu0 0
        %1376 = vmatpush1.bf16.msra.mxu0 0
        %1377 = vmatprep.subr.bf16.mxu0 0
        %1378 = vmatpush1.bf16.msra.mxu0 0
        %1379 = vmatprep.subr.bf16.mxu0 0
        %1380 = vmatpush1.bf16.msra.mxu0 0
        %1381 = vmatprep.subr.bf16.mxu0 0
        %1382 = vmatpush1.bf16.msra.mxu0 0
        %1383 = vmatprep.subr.bf16.mxu0 0
        %1384 = vmatpush1.bf16.msra.mxu0 0
        %1385 = vmatprep.subr.bf16.mxu0 0
        %1386 = vmatpush1.bf16.msra.mxu0 0
        %1387 = vmatprep.subr.bf16.mxu0 0
        %1388 = vmatpush1.bf16.msra.mxu0 0
        %1389 = vmatprep.subr.bf16.mxu0 0
        %1390 = vmatpush1.bf16.msra.mxu0 0
        %1391 = vmatprep.mubr.bf16.mxu0 0
        %1392 = vmatmul.mubr.bf16.gmra.mrb[0].mxu0 %v1230
        %v1393 = vpop.f32.mrb[0].mxu0
        %v1394 = vadd.f32 %v1353, %v1393
        %v1395 = vpop.f32.mrb[0].mxu0
        %v1396 = vpop.f32.mrb[0].mxu0
        %v1397 = vadd.f32 %v1356, %v1396
        %v1398 = vpop.f32.mrb[0].mxu0
        %1399 = vdwg.mxu0
        %v1400 = vmax.f32 %v1310, 0.0
        %v1401 = vmax.f32 %v1312, 0.0
        %v1402 = vmax.f32 %v1394, 0.0
        %v1403 = vmax.f32 %v1314, 0.0
        %v1404 = vmax.f32 %v1316, 0.0
        %v1405 = vmax.f32 %v1397, 0.0
        %v1406 = vpack.c.bf16 %v1403, %v1400
        %v1407 = vpack.c.bf16 %v1404, %v1401
        %v1408 = vpack.c.bf16 %v1405, %v1402
        %v1409 = vld [vmem:[%s457] sm:$0xf]
        %v1410 = vld [vmem:[%s457 + $0x4] sm:$0xf]
        %v1411 = vld [vmem:[%s457 + $0x8] sm:$0xf]
        %v1412 = vld [vmem:[%s457 + $0xc] sm:$0xf]
        %v1413 = vld [vmem:[%s457 + $0x10] sm:$0xf]
        %v1414 = vld [vmem:[%s457 + $0x14] sm:$0xf]
        %v1415 = vld [vmem:[%s457 + $0x18] sm:$0xf]
        %v1416 = vld [vmem:[%s457 + $0x1c] sm:$0xf]
        %v1417 = vld [vmem:[%s457 + $0x20] sm:$0xf]
        %v1418 = vld [vmem:[%s457 + $0x24] sm:$0xf]
        %v1419 = vld [vmem:[%s457 + $0x28] sm:$0xf]
        %v1420 = vld [vmem:[%s457 + $0x2c] sm:$0xf]
        %v1421 = vld [vmem:[%s457 + $0x30] sm:$0xf]
        %v1422 = vld [vmem:[%s457 + $0x34] sm:$0xf]
        %v1423 = vld [vmem:[%s457 + $0x38] sm:$0xf]
        %v1424 = vld [vmem:[%s457 + $0x3c] sm:$0xf]
        %v1425 = vld [vmem:[%s457 + $0x40] sm:$0xf]
        %v1426 = vld [vmem:[%s457 + $0x44] sm:$0xf]
        %v1427 = vld [vmem:[%s457 + $0x48] sm:$0xf]
        %v1428 = vld [vmem:[%s457 + $0x4c] sm:$0xf]
        %v1429 = vld [vmem:[%s457 + $0x50] sm:$0xf]
        %v1430 = vld [vmem:[%s457 + $0x54] sm:$0xf]
        %v1431 = vld [vmem:[%s457 + $0x58] sm:$0xf]
        %v1432 = vld [vmem:[%s457 + $0x5c] sm:$0xf]
        %v1433 = vld [vmem:[%s457 + $0x60] sm:$0xf]
        %v1434 = vld [vmem:[%s457 + $0x64] sm:$0xf]
        %v1435 = vld [vmem:[%s457 + $0x68] sm:$0xf]
        %v1436 = vld [vmem:[%s457 + $0x6c] sm:$0xf]
        %v1437 = vld [vmem:[%s457 + $0x70] sm:$0xf]
        %v1438 = vld [vmem:[%s457 + $0x74] sm:$0xf]
        %v1439 = vld [vmem:[%s457 + $0x78] sm:$0xf]
        %v1440 = vld [vmem:[%s457 + $0x7c] sm:$0xf]
        %v1441 = vld [vmem:[%s457 + $0x80] sm:$0xf]
        %v1442 = vld [vmem:[%s457 + $0x84] sm:$0xf]
        %v1443 = vld [vmem:[%s457 + $0x88] sm:$0xf]
        %v1444 = vld [vmem:[%s457 + $0x8c] sm:$0xf]
        %v1445 = vld [vmem:[%s457 + $0x90] sm:$0xf]
        %v1446 = vld [vmem:[%s457 + $0x94] sm:$0xf]
        %v1447 = vld [vmem:[%s457 + $0x98] sm:$0xf]
        %v1448 = vld [vmem:[%s457 + $0x9c] sm:$0xf]
        %v1449 = vld [vmem:[%s460] sm:$0x1]
        %v1451 = vlaneseq
        %v1452 = vshrl.u32 %v1451, 7
        %v1453 = vsub.s32 0, %v1452
        %v1454 = vrot.slane %v1449, %v1453
        %v1496 = vunpack.c.l.b16 %v1409
        %v1497 = vunpack.c.l.b16 %v1410
        %v1498 = vunpack.c.l.b16 %v1411
        %v1499 = vunpack.c.l.b16 %v1412
        %v1500 = vunpack.c.l.b16 %v1413
        %v1501 = vunpack.c.l.b16 %v1414
        %v1502 = vunpack.c.l.b16 %v1415
        %v1503 = vunpack.c.l.b16 %v1416
        %v1504 = vunpack.c.l.b16 %v1417
        %v1505 = vunpack.c.l.b16 %v1418
        %v1506 = vunpack.c.l.b16 %v1419
        %v1507 = vunpack.c.l.b16 %v1420
        %v1508 = vunpack.c.l.b16 %v1421
        %v1509 = vunpack.c.l.b16 %v1422
        %v1510 = vunpack.c.l.b16 %v1423
        %v1511 = vunpack.c.l.b16 %v1424
        %v1512 = vunpack.c.l.b16 %v1425
        %v1513 = vunpack.c.l.b16 %v1426
        %v1514 = vunpack.c.l.b16 %v1427
        %v1515 = vunpack.c.l.b16 %v1428
        %v1516 = vunpack.c.l.b16 %v1429
        %v1517 = vunpack.c.l.b16 %v1430
        %v1518 = vunpack.c.l.b16 %v1431
        %v1519 = vunpack.c.l.b16 %v1432
        %v1520 = vunpack.c.l.b16 %v1433
        %v1521 = vunpack.c.l.b16 %v1434
        %v1522 = vunpack.c.l.b16 %v1435
        %v1523 = vunpack.c.l.b16 %v1436
        %v1524 = vunpack.c.l.b16 %v1437
        %v1525 = vunpack.c.l.b16 %v1438
        %v1526 = vunpack.c.l.b16 %v1439
        %v1527 = vunpack.c.l.b16 %v1440
        %v1528 = vunpack.c.l.b16 %v1441
        %v1529 = vunpack.c.l.b16 %v1442
        %v1530 = vunpack.c.l.b16 %v1443
        %v1531 = vunpack.c.l.b16 %v1444
        %v1532 = vunpack.c.l.b16 %v1445
        %v1533 = vunpack.c.l.b16 %v1446
        %v1534 = vunpack.c.l.b16 %v1447
        %v1535 = vunpack.c.l.b16 %v1448
        %v1536 = vpack.c.b16 %v1497, %v1496
        %v1537 = vpack.c.b16 %v1499, %v1498
        %v1538 = vpack.c.b16 %v1501, %v1500
        %v1539 = vpack.c.b16 %v1503, %v1502
        %v1540 = vpack.c.b16 %v1505, %v1504
        %v1541 = vpack.c.b16 %v1507, %v1506
        %v1542 = vpack.c.b16 %v1509, %v1508
        %v1543 = vpack.c.b16 %v1511, %v1510
        %v1544 = vpack.c.b16 %v1513, %v1512
        %v1545 = vpack.c.b16 %v1515, %v1514
        %v1546 = vpack.c.b16 %v1517, %v1516
        %v1547 = vpack.c.b16 %v1519, %v1518
        %v1548 = vpack.c.b16 %v1521, %v1520
        %v1549 = vpack.c.b16 %v1523, %v1522
        %v1550 = vpack.c.b16 %v1525, %v1524
        %v1551 = vpack.c.b16 %v1527, %v1526
        %v1552 = vpack.c.b16 %v1529, %v1528
        %v1553 = vpack.c.b16 %v1531, %v1530
        %v1554 = vpack.c.b16 %v1533, %v1532
        %v1555 = vpack.c.b16 %v1535, %v1534
        %v1577 = vsel %vm631, %v1408, 0
        %1579 = vmatprep.subr.bf16.mxu0 0
        %1580 = vmatpush1.bf16.msra.mxu0 %v1536
        %1581 = vmatprep.subr.bf16.mxu0 0
        %1582 = vmatpush1.bf16.msra.mxu0 %v1537
        %1583 = vmatprep.subr.bf16.mxu0 0
        %1584 = vmatpush1.bf16.msra.mxu0 %v1538
        %1585 = vmatprep.subr.bf16.mxu0 0
        %1586 = vmatpush1.bf16.msra.mxu0 %v1539
        %1587 = vmatprep.subr.bf16.mxu0 0
        %1588 = vmatpush1.bf16.msra.mxu0 %v1540
        %1589 = vmatprep.subr.bf16.mxu0 0
        %1590 = vmatpush1.bf16.msra.mxu0 %v1541
        %1591 = vmatprep.subr.bf16.mxu0 0
        %1592 = vmatpush1.bf16.msra.mxu0 %v1542
        %1593 = vmatprep.subr.bf16.mxu0 0
        %1594 = vmatpush1.bf16.msra.mxu0 %v1543
        %1595 = vmatprep.subr.bf16.mxu0 0
        %1596 = vmatpush1.bf16.msra.mxu0 %v1544
        %1597 = vmatprep.subr.bf16.mxu0 0
        %1598 = vmatpush1.bf16.msra.mxu0 %v1545
        %1599 = vmatprep.subr.bf16.mxu0 0
        %1600 = vmatpush1.bf16.msra.mxu0 %v1546
        %1601 = vmatprep.subr.bf16.mxu0 0
        %1602 = vmatpush1.bf16.msra.mxu0 %v1547
        %1603 = vmatprep.subr.bf16.mxu0 0
        %1604 = vmatpush1.bf16.msra.mxu0 %v1548
        %1605 = vmatprep.subr.bf16.mxu0 0
        %1606 = vmatpush1.bf16.msra.mxu0 %v1549
        %1607 = vmatprep.subr.bf16.mxu0 0
        %1608 = vmatpush1.bf16.msra.mxu0 %v1550
        %1609 = vmatprep.subr.bf16.mxu0 0
        %1610 = vmatpush1.bf16.msra.mxu0 %v1551
        %1611 = vmatprep.mubr.bf16.mxu0 %v1407
        %1612 = vmatmul.mubr.bf16.gmra.mrb[0].mxu0 %v1406
        %v1613 = vpop.f32.mrb[0].mxu0
        %v1614 = vadd.f32 %v1454, %v1613
        %v1615 = vpop.f32.mrb[0].mxu0
        %v1616 = vpop.f32.mrb[0].mxu0
        %v1617 = vadd.f32 %v1454, %v1616
        %v1618 = vpop.f32.mrb[0].mxu0
        %1619 = vdwg.mxu0
        %1620 = vmatprep.subr.bf16.mxu0 0
        %1621 = vmatpush1.bf16.msra.mxu0 %v1552
        %1622 = vmatprep.subr.bf16.mxu0 0
        %1623 = vmatpush1.bf16.msra.mxu0 %v1553
        %1624 = vmatprep.subr.bf16.mxu0 0
        %1625 = vmatpush1.bf16.msra.mxu0 %v1554
        %1626 = vmatprep.subr.bf16.mxu0 0
        %1627 = vmatpush1.bf16.msra.mxu0 %v1555
        %1628 = vmatprep.subr.bf16.mxu0 0
        %1629 = vmatpush1.bf16.msra.mxu0 0
        %1630 = vmatprep.subr.bf16.mxu0 0
        %1631 = vmatpush1.bf16.msra.mxu0 0
        %1632 = vmatprep.subr.bf16.mxu0 0
        %1633 = vmatpush1.bf16.msra.mxu0 0
        %1634 = vmatprep.subr.bf16.mxu0 0
        %1635 = vmatpush1.bf16.msra.mxu0 0
        %1636 = vmatprep.subr.bf16.mxu0 0
        %1637 = vmatpush1.bf16.msra.mxu0 0
        %1638 = vmatprep.subr.bf16.mxu0 0
        %1639 = vmatpush1.bf16.msra.mxu0 0
        %1640 = vmatprep.subr.bf16.mxu0 0
        %1641 = vmatpush1.bf16.msra.mxu0 0
        %1642 = vmatprep.subr.bf16.mxu0 0
        %1643 = vmatpush1.bf16.msra.mxu0 0
        %1644 = vmatprep.subr.bf16.mxu0 0
        %1645 = vmatpush1.bf16.msra.mxu0 0
        %1646 = vmatprep.subr.bf16.mxu0 0
        %1647 = vmatpush1.bf16.msra.mxu0 0
        %1648 = vmatprep.subr.bf16.mxu0 0
        %1649 = vmatpush1.bf16.msra.mxu0 0
        %1650 = vmatprep.subr.bf16.mxu0 0
        %1651 = vmatpush1.bf16.msra.mxu0 0
        %1652 = vmatprep.mubr.bf16.mxu0 0
        %1653 = vmatmul.mubr.bf16.gmra.mrb[0].mxu0 %v1577
        %v1654 = vpop.f32.mrb[0].mxu0
        %v1655 = vadd.f32 %v1614, %v1654
        %v1656 = vpop.f32.mrb[0].mxu0
        %v1657 = vpop.f32.mrb[0].mxu0
        %v1658 = vadd.f32 %v1617, %v1657
        %v1659 = vpop.f32.mrb[0].mxu0
        %1660 = vdwg.mxu0
        %1661 = vst.msk [vmem:[#allocation2] sm:$0xff] %vm531, %v1655
        %1662 = vst.msk [vmem:[#allocation2 + $0x8] sm:$0xff] %vm531, %v1658
        %p1663 = scmp.eq.s32.totalorder %s24, 2
        // Predicated region
        $region65: #{byol_loss.1} parent=55 // pred_check
          %p1664 = pneg %p1663
        $region66: #{byol_loss.1} parent=55 // pred_check_branch
          %1666 = sbr.rel (%p1664) target = $region68
        $region67: #{byol_loss.1} parent=55 // pred_region
          %v1667 = vld [vmem:[%s0] sm:$0xff]
          %v1668 = vld [vmem:[%s0 + $0x8] sm:$0xff]
          %v1669 = vld [vmem:[#allocation2] sm:$0xff]
          %v1670 = vld [vmem:[#allocation2 + $0x8] sm:$0xff]
          %v1671 = vmul.f32 %v1669, %v1669
          %v1672 = vmul.f32 %v1670, %v1670
          %v1673 = vsel %vm531, %v1671, 0.0
          %1674 = vadd.xlane.f32.xlu0 %v1673
          %v1675 = vpop.xlane.xlu0 %1674
          %v1676 = vsel %vm531, %v1672, 0.0
          %1677 = vadd.xlane.f32.xlu0 %v1676
          %v1678 = vpop.xlane.xlu0 %1677
          %v1679 = vmax.f32 %v1675, 1e-24
          %v1680 = vmax.f32 %v1678, 1e-24
          %v1681 = vrsqrt.pop %v1679
          %v1682 = vrsqrt.pop %v1680
          %v1683 = vmul.f32 %v1669, %v1681
          %v1684 = vmul.f32 %v1670, %v1682
          %v1685 = vmul.f32 %v1667, %v1667
          %v1686 = vmul.f32 %v1668, %v1668
          %v1687 = vsel %vm531, %v1685, 0.0
          %1688 = vadd.xlane.f32.xlu0 %v1687
          %v1689 = vpop.xlane.xlu0 %1688
          %v1690 = vsel %vm531, %v1686, 0.0
          %1691 = vadd.xlane.f32.xlu0 %v1690
          %v1692 = vpop.xlane.xlu0 %1691
          %v1693 = vmax.f32 %v1689, 1e-24
          %v1694 = vmax.f32 %v1692, 1e-24
          %v1695 = vrsqrt.pop %v1693
          %v1696 = vrsqrt.pop %v1694
          %v1697 = vmul.f32 %v1667, %v1695
          %v1698 = vmul.f32 %v1668, %v1696
          %v1699 = vmul.f32 %v1683, %v1698
          %v1700 = vsel %vm531, %v1699, 0.0
          %1701 = vadd.xlane.f32.xlu0 %v1700
          %v1702 = vpop.xlane.xlu0 %1701
          %v1703 = vmul.f32 %v1684, %v1697
          %v1704 = vsel %vm531, %v1703, 0.0
          %1705 = vadd.xlane.f32.xlu0 %v1704
          %v1706 = vpop.xlane.xlu0 %1705
          %vm1707 = vcmask 7168
          %v1708 = vsel %vm1707, %v1702, 0.0
          %1709 = vadd.xlane.f32.xlu0 %v1708
          %v1710 = vpop.xlane.xlu0 %1709
          %v1711 = vrot.slane %v1710, 4
          %v1712 = vadd.f32 %v1710, %v1711
          %v1713 = vrot.slane %v1712, 2
          %v1714 = vadd.f32 %v1712, %v1713
          %v1715 = vrot.slane %v1714, 1
          %v1716 = vadd.f32 %v1714, %v1715
          %s1717 = vtos %v1716
          %v1718 = vrcp.pop 8.0
          %s1719 = vtos %v1718
          %s1720 = smul.f32 %s1717, %s1719
          %v1721 = vsel %vm1707, %v1706, 0.0
          %1722 = vadd.xlane.f32.xlu0 %v1721
          %v1723 = vpop.xlane.xlu0 %1722
          %v1724 = vrot.slane %v1723, 4
          %v1725 = vadd.f32 %v1723, %v1724
          %v1726 = vrot.slane %v1725, 2
          %v1727 = vadd.f32 %v1725, %v1726
          %v1728 = vrot.slane %v1727, 1
          %v1729 = vadd.f32 %v1727, %v1728
          %s1730 = vtos %v1729
          %v1731 = vrcp.pop 8.0
          %s1732 = vtos %v1731
          %s1733 = smul.f32 %s1730, %s1732
          %s1734 = sadd.f32 %s1720, %s1733
          %s1735 = smul.f32 %s1734, 2.0
          %s1736 = ssub.f32 4.0, %s1735
          %s1737 = scalar_lea.smem [#allocation6], 0
          %1738 = sst [smem:[%s1737]] %s1736
        $region68: #{byol_loss.1} parent=55 // pred_fallthru
          _
        // Predicated region
        $region69: #{byol_loss.1} parent=55 // pred_check
          %p1739 = pneg %p266
        $region70: #{byol_loss.1} parent=55 // pred_check_branch
          %1741 = sbr.rel (%p1739) target = $region72
        $region71: #{byol_loss.1} parent=55 // pred_region
          %s1743 = ssub.s32 16, 16
          %1744 = vsyncadd [#allocation5], %s1743
          %1747 = dma.smem_to_hbm [#allocation6], 16, %s9, [#allocation5]
        $region72: #{byol_loss.1} parent=55 // pred_fallthru
          _
        // Predicated region
        $region73: #{byol_loss.1} parent=55 // pred_check
          %p1748 = pneg %p266
        $region74: #{byol_loss.1} parent=55 // pred_check_branch
          %1750 = sbr.rel (%p1748) target = $region76
        $region75: #{byol_loss.1} parent=55 // pred_region
          %1751 = dma.done [#allocation5], 16
        $region76: #{byol_loss.1} parent=55 // pred_fallthru
          _
        %1752 = sfence
      $region56: #{byol_loss.1} parent=5 // pred_fallthru
        _
      %p1753 = scmp.le.s32.totalorder 2, %s19
      // Predicated region
      $region77: #{byol_loss.1} parent=5 // pred_check
        %p1754 = pneg %p1753
      $region78: #{byol_loss.1} parent=5 // pred_check_branch
        %1756 = sbr.rel (%p1754) target = $region80
      $region79: #{byol_loss.1} parent=5 // pred_region
        %s1757 = ssub.s32 %s19, 2
      $region80: #{byol_loss.1} parent=5 // pred_fallthru
        _
    $region6: #{byol_loss.1} parent=1 // loop_footer
      %s23 = sadd.s32 1, %s19
    $region7: #{byol_loss.1} parent=1 // loop_footer_branch
      %18 = sbr.rel target = $region3
    $region8: #{byol_loss.1} parent=1 // loop_exit
      _
    %1758 = vsyncpa [#allocation4], 1
    %s1759 = scalar_lea.sflag [#allocation4], 1
    %1760 = vsyncpa %s1759, 1
    %1761 = vsyncpa [#allocation5], 1
    %s1762 = scalar_lea.sflag [#allocation5], 1
    %1763 = vsyncpa %s1762, 1

</llo_original>
